<compile_context>
chip_gen: v5e
topology: v5e:2x2
jax: 0.10.0
libtpu: 0.0.40
codegen_flags: <defaults>
</compile_context>

<pallas_src>
import functools

import jax
import jax.numpy as jnp
from jax.experimental import pallas as pl
from jax.experimental.pallas import tpu as pltpu

STATE_DIM = 32 * 32          # hard-coded in the PyTorch module (32*32)
ACTION_DIM = 4               # small, consistent with module's action_dim arg
H1, H2, OUT = 512, 256, 1
IN_DIM = STATE_DIM + ACTION_DIM
MAX_TB = 512                 # batch tile cap (multiple of 8, fills MXU rows)


def _cdiv(a, b):
    return -(-a // b)


def _device_kind() -> str:
    try:
        return jax.devices()[0].device_kind.lower()
    except Exception:  # pragma: no cover - defensive only
        return ""


def _choose_batch_tile(B, force_multi_tile):
    """Pick (TB, n_tiles) with minimal padding (<= 7 rows, masked by Pallas)."""
    want_two = force_multi_tile and B > 128            # one tile per v7x TC
    if B <= MAX_TB and not want_two:
        return B, 1                                    # full-batch block, no pad
    n_tiles = max(2 if want_two else 1, _cdiv(B, MAX_TB))
    tb = ((_cdiv(B, n_tiles) + 7) // 8) * 8            # multiple of 8 sublanes
    return tb, _cdiv(B, tb)


def dqn_kernel(s_ref, a_ref, w1s_ref, w1a_ref, b1_ref, w2_ref, b2_ref,
               w3_ref, b3_ref, o_ref, *, action_on_mxu):
    # s_ref: (TB, 1024) bf16 (or f32 -> cast below is then the fallback path)
    # a_ref: (TB, A) f32;  w1s/w2: bf16 (MXU); w1a/biases/w3: f32
    s_bf = s_ref[...].astype(jnp.bfloat16)   # no-op when state is already bf16

    # fc1: big matmul on the MXU (K=1024, bf16 x bf16 -> f32 accumulate)
    h1 = jnp.dot(s_bf, w1s_ref[...], preferred_element_type=jnp.float32)
    h1 = h1 + b1_ref[...]

    # fc1: tiny action contribution (per-generation switch)
    a = a_ref[...]                            # (TB, A) f32
    w1a = w1a_ref[...]                        # (A, H1) f32
    if action_on_mxu:
        # v6e/v7x: K=4 bf16 dot -> MXU has slack, keeps VALU off the crit path
        h1 = h1 + jnp.dot(a.astype(jnp.bfloat16), w1a.astype(jnp.bfloat16),
                          preferred_element_type=jnp.float32)
    else:
        # v5e: MXU is the binding unit -> keep this on the VPU
        for j in range(ACTION_DIM):
            h1 = h1 + a[:, j:j + 1] * w1a[j:j + 1, :]
    h1 = jnp.maximum(h1, 0.0)                 # ReLU in f32 (VPU)

    # fc2: MXU matmul, f32 accumulate, f32 bias + ReLU
    h2 = jnp.dot(h1.astype(jnp.bfloat16), w2_ref[...],
                 preferred_element_type=jnp.float32)
    h2 = jnp.maximum(h2 + b2_ref[...], 0.0)

    # out (N=1): lane reduction on VPU/XLU instead of a 1-column MXU pass
    o_ref[...] = jnp.sum(h2 * w3_ref[...], axis=-1, keepdims=True) + b3_ref[...]


def dq_network_forward(state, action, params, *, action_on_mxu=None,
                       force_multi_tile=None):
    """Pallas forward: Q = out(relu(fc2(relu(fc1_state(s) + fc1_action(a))))).

    `state` should be provided in bfloat16 for minimal HBM traffic (f32 also
    works; it is then cast in-kernel).
    """
    w1s, w1a, b1, w2, b2, w3, b3 = params
    B = state.shape[0]

    kind = _device_kind()
    if action_on_mxu is None:
        action_on_mxu = "v5" not in kind       # MXU path on v6e / v7x / unknown
    if force_multi_tile is None:
        force_multi_tile = "v7" in kind        # 2 TensorCores per chip on v7x

    TB, n_tiles = _choose_batch_tile(B, force_multi_tile)

    const = lambda shape: pl.BlockSpec(shape, lambda i: (0, 0))

    out = pl.pallas_call(
        functools.partial(dqn_kernel, action_on_mxu=action_on_mxu),
        out_shape=jax.ShapeDtypeStruct((B, OUT), jnp.float32),
        grid_spec=pltpu.PrefetchScalarGridSpec(
            num_scalar_prefetch=0,
            grid=(n_tiles,),
            in_specs=[
                pl.BlockSpec((TB, STATE_DIM), lambda i: (i, 0)),   # state tile (bf16)
                pl.BlockSpec((TB, ACTION_DIM), lambda i: (i, 0)),  # action tile (f32)
                const((STATE_DIM, H1)),                            # w1_state (bf16)
                const((ACTION_DIM, H1)),                           # w1_action (f32)
                const((1, H1)),                                    # b1
                const((H1, H2)),                                   # w2 (bf16)
                const((1, H2)),                                    # b2
                const((1, H2)),                                    # w3 row (f32)
                const((1, 1)),                                     # b3
            ],
            out_specs=pl.BlockSpec((TB, OUT), lambda i: (i, 0)),
        ),
        compiler_params=pltpu.CompilerParams(
            dimension_semantics=("parallel",),
            vmem_limit_bytes=32 * 1024 * 1024),
    )(state, action, w1s, w1a, b1, w2, b2, w3, b3)

    return out


def init_params(key):
    """Mimics PyTorch Linear default init U(-1/sqrt(fan_in), 1/sqrt(fan_in)).

    fc1's weight is generated as one (IN_DIM, H1) matrix (fan_in = 1028) and
    split into state/action parts; large weights are stored in bf16.
    """
    keys = jax.random.split(key, 6)

    def uniform(k, shape, fan_in):
        bound = 1.0 / float(fan_in) ** 0.5
        return jax.random.uniform(k, shape, jnp.float32, -bound, bound)

    w1_full = uniform(keys[0], (IN_DIM, H1), IN_DIM)
    w1s = w1_full[:STATE_DIM].astype(jnp.bfloat16)       # (1024, 512) bf16
    w1a = w1_full[STATE_DIM:]                            # (A, 512)    f32
    b1 = uniform(keys[1], (1, H1), IN_DIM)               # f32

    w2 = uniform(keys[2], (H1, H2), H1).astype(jnp.bfloat16)
    b2 = uniform(keys[3], (1, H2), H1)

    w3 = uniform(keys[4], (1, H2), H2)                   # out weight as a row, f32
    b3 = uniform(keys[5], (1, 1), H2)

    return (w1s, w1a, b1, w2, b2, w3, b3)


def reference_forward(state, action, params, *, action_on_mxu=None):
    """Pure-JAX reference using the same mixed-precision math as the kernel."""
    if action_on_mxu is None:
        action_on_mxu = "v5" not in _device_kind()
    w1s, w1a, b1, w2, b2, w3, b3 = params
    h1 = jnp.dot(state.astype(jnp.bfloat16), w1s,
                 preferred_element_type=jnp.float32) + b1
    if action_on_mxu:
        h1 = h1 + jnp.dot(action.astype(jnp.bfloat16), w1a.astype(jnp.bfloat16),
                          preferred_element_type=jnp.float32)
    else:
        h1 = h1 + jnp.dot(action, w1a)
    h1 = jnp.maximum(h1, 0.0)
    h2 = jnp.dot(h1.astype(jnp.bfloat16), w2,
                 preferred_element_type=jnp.float32) + b2
    h2 = jnp.maximum(h2, 0.0)
    return jnp.sum(h2 * w3, axis=-1, keepdims=True) + b3


if __name__ == "__main__":
    key = jax.random.PRNGKey(0)
    k_data, k_params = jax.random.split(key, 2)
    params = init_params(k_params)

    # B=2: single full-batch tile; B=300: exercises the multi-tile / ragged
    # last-block path on v7x and the single 300-row block elsewhere.
    for B in (2, 300):
        ks, ka = jax.random.split(jax.random.fold_in(k_data, B), 2)
        state = jax.random.normal(ks, (B, STATE_DIM), jnp.float32)
        state = state.astype(jnp.bfloat16)     # producer-side bf16 (no in-kernel cast)
        action = jax.random.uniform(ka, (B, ACTION_DIM), jnp.float32,
                                    minval=-1.0, maxval=1.0)
        # action_bounds of the PyTorch module are unused in forward()

        q = jax.block_until_ready(dq_network_forward(state, action, params))
        q_ref = reference_forward(state, action, params)

        assert q.shape == (B, 1)
        assert jnp.allclose(q, q_ref, atol=2e-3, rtol=2e-3), \
            f"mismatch vs JAX reference at B={B}"

    print("KERNEL_OK")
</pallas_src>

<mosaic_0001>
module attributes {stable_mosaic.version = 11 : i64} {
  func.func @dqn_kernel(%arg0: i32, %arg1: memref<2x1024xbf16, #tpu.memory_space<vmem>>, %arg2: memref<2x4xf32, #tpu.memory_space<vmem>>, %arg3: memref<1024x512xbf16, #tpu.memory_space<vmem>>, %arg4: memref<4x512xf32, #tpu.memory_space<vmem>>, %arg5: memref<1x512xf32, #tpu.memory_space<vmem>>, %arg6: memref<512x256xbf16, #tpu.memory_space<vmem>>, %arg7: memref<1x256xf32, #tpu.memory_space<vmem>>, %arg8: memref<1x256xf32, #tpu.memory_space<vmem>>, %arg9: memref<1x1xf32, #tpu.memory_space<vmem>>, %arg10: memref<2x1xf32, #tpu.memory_space<vmem>>) attributes {dimension_semantics = [#tpu.dimension_semantics<parallel>], iteration_bounds = array<i64: 1>, scalar_prefetch = 0 : i64, scratch_operands = 0 : i64, tpu.core_type = #tpu.core_type<tc>, window_params = [{transform_indices = @transform_0, window_bounds = array<i64: 2, 1024>}, {transform_indices = @transform_1, window_bounds = array<i64: 2, 4>}, {pipeline_mode = #tpu.pipeline_mode<synchronous>, transform_indices = @transform_2, window_bounds = array<i64: 1024, 512>}, {pipeline_mode = #tpu.pipeline_mode<synchronous>, transform_indices = @transform_3, window_bounds = array<i64: 4, 512>}, {pipeline_mode = #tpu.pipeline_mode<synchronous>, transform_indices = @transform_4, window_bounds = array<i64: 1, 512>}, {pipeline_mode = #tpu.pipeline_mode<synchronous>, transform_indices = @transform_5, window_bounds = array<i64: 512, 256>}, {pipeline_mode = #tpu.pipeline_mode<synchronous>, transform_indices = @transform_6, window_bounds = array<i64: 1, 256>}, {pipeline_mode = #tpu.pipeline_mode<synchronous>, transform_indices = @transform_7, window_bounds = array<i64: 1, 256>}, {pipeline_mode = #tpu.pipeline_mode<synchronous>, transform_indices = @transform_8, window_bounds = array<i64: 1, 1>}, {transform_indices = @transform_9, window_bounds = array<i64: 2, 1>}]} {
    %c0 = arith.constant 0 : index
    %c0_0 = arith.constant 0 : index
    %0 = vector.load %arg1[%c0, %c0_0] : memref<2x1024xbf16, #tpu.memory_space<vmem>>, vector<2x1024xbf16>
    %c0_1 = arith.constant 0 : index
    %c0_2 = arith.constant 0 : index
    %1 = vector.load %arg3[%c0_1, %c0_2] : memref<1024x512xbf16, #tpu.memory_space<vmem>>, vector<1024x512xbf16>
    %cst = arith.constant dense<0.000000e+00> : vector<2x512xf32>
    %2 = tpu.matmul %0, %1, %cst {dimension_numbers = #tpu.dot_dimension_numbers<[1], [0], [0], [1], [0, 0, 1, 1], [], []>} : vector<2x1024xbf16>, vector<1024x512xbf16>, vector<2x512xf32> -> vector<2x512xf32>
    %c0_3 = arith.constant 0 : index
    %c0_4 = arith.constant 0 : index
    %3 = vector.load %arg5[%c0_3, %c0_4] : memref<1x512xf32, #tpu.memory_space<vmem>>, vector<1x512xf32>
    %4 = vector.broadcast %3 : vector<1x512xf32> to vector<2x512xf32>
    %5 = arith.addf %2, %4 : vector<2x512xf32>
    %c0_5 = arith.constant 0 : index
    %c0_6 = arith.constant 0 : index
    %6 = vector.load %arg2[%c0_5, %c0_6] : memref<2x4xf32, #tpu.memory_space<vmem>>, vector<2x4xf32>
    %c0_7 = arith.constant 0 : index
    %c0_8 = arith.constant 0 : index
    %7 = vector.load %arg4[%c0_7, %c0_8] : memref<4x512xf32, #tpu.memory_space<vmem>>, vector<4x512xf32>
    %8 = arith.truncf %6 : vector<2x4xf32> to vector<2x4xbf16>
    %9 = arith.truncf %7 : vector<4x512xf32> to vector<4x512xbf16>
    %cst_9 = arith.constant dense<0.000000e+00> : vector<2x512xf32>
    %10 = tpu.matmul %8, %9, %cst_9 {dimension_numbers = #tpu.dot_dimension_numbers<[1], [0], [0], [1], [0, 0, 1, 1], [], []>} : vector<2x4xbf16>, vector<4x512xbf16>, vector<2x512xf32> -> vector<2x512xf32>
    %11 = arith.addf %5, %10 : vector<2x512xf32>
    %cst_10 = arith.constant 0.000000e+00 : f32
    %12 = vector.broadcast %cst_10 : f32 to vector<2x512xf32>
    %13 = arith.maximumf %11, %12 : vector<2x512xf32>
    %14 = arith.truncf %13 : vector<2x512xf32> to vector<2x512xbf16>
    %c0_11 = arith.constant 0 : index
    %c0_12 = arith.constant 0 : index
    %15 = vector.load %arg6[%c0_11, %c0_12] : memref<512x256xbf16, #tpu.memory_space<vmem>>, vector<512x256xbf16>
    %cst_13 = arith.constant dense<0.000000e+00> : vector<2x256xf32>
    %16 = tpu.matmul %14, %15, %cst_13 {dimension_numbers = #tpu.dot_dimension_numbers<[1], [0], [0], [1], [0, 0, 1, 1], [], []>} : vector<2x512xbf16>, vector<512x256xbf16>, vector<2x256xf32> -> vector<2x256xf32>
    %c0_14 = arith.constant 0 : index
    %c0_15 = arith.constant 0 : index
    %17 = vector.load %arg7[%c0_14, %c0_15] : memref<1x256xf32, #tpu.memory_space<vmem>>, vector<1x256xf32>
    %18 = vector.broadcast %17 : vector<1x256xf32> to vector<2x256xf32>
    %19 = arith.addf %16, %18 : vector<2x256xf32>
    %cst_16 = arith.constant 0.000000e+00 : f32
    %20 = vector.broadcast %cst_16 : f32 to vector<2x256xf32>
    %21 = arith.maximumf %19, %20 : vector<2x256xf32>
    %c0_17 = arith.constant 0 : index
    %c0_18 = arith.constant 0 : index
    %22 = vector.load %arg8[%c0_17, %c0_18] : memref<1x256xf32, #tpu.memory_space<vmem>>, vector<1x256xf32>
    %23 = vector.broadcast %22 : vector<1x256xf32> to vector<2x256xf32>
    %24 = arith.mulf %21, %23 : vector<2x256xf32>
    %cst_19 = arith.constant dense<0.000000e+00> : vector<2xf32>
    %25 = vector.multi_reduction <add>, %24, %cst_19 [1] : vector<2x256xf32> to vector<2xf32>
    %26 = vector.shape_cast %25 : vector<2xf32> to vector<2x1xf32>
    %c0_20 = arith.constant 0 : index
    %c0_21 = arith.constant 0 : index
    %27 = vector.load %arg9[%c0_20, %c0_21] : memref<1x1xf32, #tpu.memory_space<vmem>>, vector<1x1xf32>
    %28 = vector.broadcast %27 : vector<1x1xf32> to vector<2x1xf32>
    %29 = arith.addf %26, %28 : vector<2x1xf32>
    %c0_22 = arith.constant 0 : index
    %c0_23 = arith.constant 0 : index
    %30 = vector.load %arg10[%c0_22, %c0_23] : memref<2x1xf32, #tpu.memory_space<vmem>>, vector<2x1xf32>
    tpu.vector_store %arg10[%c0_22, %c0_23], %29 {strides = array<i32>} : memref<2x1xf32, #tpu.memory_space<vmem>>, vector<2x1xf32>,
    return
  }
  func.func @transform_0(%arg0: i32) -> (i32, i32) {
    %c0_i32 = arith.constant 0 : i32
    %c0_i32_0 = arith.constant 0 : i32
    return %arg0, %c0_i32 : i32, i32
  }
  func.func @transform_1(%arg0: i32) -> (i32, i32) {
    %c0_i32 = arith.constant 0 : i32
    %c0_i32_0 = arith.constant 0 : i32
    return %arg0, %c0_i32 : i32, i32
  }
  func.func @transform_2(%arg0: i32) -> (i32, i32) {
    %c0_i32 = arith.constant 0 : i32
    %c0_i32_0 = arith.constant 0 : i32
    %c0_i32_1 = arith.constant 0 : i32
    return %c0_i32, %c0_i32_0 : i32, i32
  }
  func.func @transform_3(%arg0: i32) -> (i32, i32) {
    %c0_i32 = arith.constant 0 : i32
    %c0_i32_0 = arith.constant 0 : i32
    %c0_i32_1 = arith.constant 0 : i32
    return %c0_i32, %c0_i32_0 : i32, i32
  }
  func.func @transform_4(%arg0: i32) -> (i32, i32) {
    %c0_i32 = arith.constant 0 : i32
    %c0_i32_0 = arith.constant 0 : i32
    %c0_i32_1 = arith.constant 0 : i32
    return %c0_i32, %c0_i32_0 : i32, i32
  }
  func.func @transform_5(%arg0: i32) -> (i32, i32) {
    %c0_i32 = arith.constant 0 : i32
    %c0_i32_0 = arith.constant 0 : i32
    %c0_i32_1 = arith.constant 0 : i32
    return %c0_i32, %c0_i32_0 : i32, i32
  }
  func.func @transform_6(%arg0: i32) -> (i32, i32) {
    %c0_i32 = arith.constant 0 : i32
    %c0_i32_0 = arith.constant 0 : i32
    %c0_i32_1 = arith.constant 0 : i32
    return %c0_i32, %c0_i32_0 : i32, i32
  }
  func.func @transform_7(%arg0: i32) -> (i32, i32) {
    %c0_i32 = arith.constant 0 : i32
    %c0_i32_0 = arith.constant 0 : i32
    %c0_i32_1 = arith.constant 0 : i32
    return %c0_i32, %c0_i32_0 : i32, i32
  }
  func.func @transform_8(%arg0: i32) -> (i32, i32) {
    %c0_i32 = arith.constant 0 : i32
    %c0_i32_0 = arith.constant 0 : i32
    %c0_i32_1 = arith.constant 0 : i32
    return %c0_i32, %c0_i32_0 : i32, i32
  }
  func.func @transform_9(%arg0: i32) -> (i32, i32) {
    %c0_i32 = arith.constant 0 : i32
    %c0_i32_0 = arith.constant 0 : i32
    return %arg0, %c0_i32 : i32, i32
  }
}

</mosaic_0001>

<llo_original>
// kernel: tpu_custom_call.1
$region0: #{tpu_custom_call.1}
  #allocation0 [shape = 'u32[]', space=smem, size = 0x4, offset = 0x4, fixed_abs, tag = 'smem constant byte address 0x4 - core index']
  #allocation1 [shape = 'u32[72,128]{1,0:T(1,128)}', space=vmem, size = 0x9000, scoped, tag = 'internal scratch']
  #allocation2 [shape = 'f32[1,1]{1,0:T(1,128)S(1)}', space=vmem, size = 0x200, scoped, tag = 'scoped memory for tpu_custom_call.1']
  %s0 = inlined_call_operand.hbm [shape: bf16[2,1024], index: 0, kind: input, shape index: {}]
  %s1 = inlined_call_operand.hbm [shape: f32[2,4], index: 1, kind: input, shape index: {}]
  %s2 = inlined_call_operand.hbm [shape: bf16[1024,512], index: 2, kind: input, shape index: {}]
  %s3 = inlined_call_operand.hbm [shape: f32[4,512], index: 3, kind: input, shape index: {}]
  %s4 = inlined_call_operand.vmem [shape: f32[1,512], index: 4, kind: input, shape index: {}]
  %s5 = inlined_call_operand.hbm [shape: bf16[512,256], index: 5, kind: input, shape index: {}]
  %s6 = inlined_call_operand.vmem [shape: f32[1,256], index: 6, kind: input, shape index: {}]
  %s7 = inlined_call_operand.vmem [shape: f32[1,256], index: 7, kind: input, shape index: {}]
  %s8 = inlined_call_operand.<no memory space> [shape: f32[1,1], index: 8, kind: input, shape index: {}]
  %s9 = inlined_call_operand.vmem [shape: f32[2,1], index: 9, kind: output, shape index: {}]
  %s10 = sld [smem:[#allocation0]]
  $region66: #{tpu_custom_call.1} parent=0
    _
  %s12 = ssub.s32 1, %s10
  %s13 = scalar_select 0, %s12, %s10
  %v14 = vstv %s8
  %15 = vst [vmem:[#allocation2] sm:$0x1] %v14
  $region1: #{tpu_custom_call.1} parent=0
    #allocation3 [shape = 'u8[4096]{0}', space=vmem, size = 0x1000, scoped, tag = 'input window, operand 0, single buffered']
    #allocation4 [shape = 's32[1]{0}', space=sflag, size = 0x4, scoped, tag = 'scoped memory for tpu_custom_call.1']
    #allocation5 [shape = 'u8[1024]{0}', space=vmem, size = 0x400, scoped, tag = 'input window, operand 1, single buffered']
    #allocation6 [shape = 's32[1]{0}', space=sflag, size = 0x4, scoped, tag = 'scoped memory for tpu_custom_call.1']
    #allocation7 [shape = 'u8[1048576]{0}', space=vmem, size = 0x100000, scoped, tag = 'input window, operand 2, single buffered']
    #allocation8 [shape = 'u8[8192]{0}', space=vmem, size = 0x2000, scoped, tag = 'input window, operand 3, single buffered']
    #allocation9 [shape = 's32[1]{0}', space=sflag, size = 0x4, scoped, tag = 'scoped memory for tpu_custom_call.1']
    #allocation10 [shape = 'u8[262144]{0}', space=vmem, size = 0x40000, scoped, tag = 'input window, operand 5, single buffered']
    %16 = vsyncpa [#allocation4], 0
    %17 = vsyncpa [#allocation6], 0
    %18 = vsyncpa [#allocation9], 0
    // Predicated region
    $region2: #{tpu_custom_call.1} parent=1 // pred_check
      _
    $region3: #{tpu_custom_call.1} parent=1 // pred_check_branch
      %20 = sbr.rel (0) target = $region5
    $region4: #{tpu_custom_call.1} parent=1 // pred_region
      %22 = vsyncadd [#allocation4], 0
      %s24 = sshll.u32 %s0, 4
      %s25 = int_to_ptr.hbm [resolvable:$true] %s24
      %s26 = sshll.u32 [#allocation3], 4
      %s27 = int_to_ptr.vmem [resolvable:$true] %s26
      %29 = dma.hbm_to_vmem [thread:$0]  %s25, 128, %s27, [#allocation4]
    $region5: #{tpu_custom_call.1} parent=1 // pred_fallthru
      _
    // Predicated region
    $region6: #{tpu_custom_call.1} parent=1 // pred_check
      _
    $region7: #{tpu_custom_call.1} parent=1 // pred_check_branch
      %31 = sbr.rel (0) target = $region9
    $region8: #{tpu_custom_call.1} parent=1 // pred_region
      %33 = vsyncadd [#allocation6], 0
      %s35 = sshll.u32 %s1, 4
      %s36 = int_to_ptr.hbm [resolvable:$true] %s35
      %s37 = sshll.u32 [#allocation5], 4
      %s38 = int_to_ptr.vmem [resolvable:$true] %s37
      %40 = dma.hbm_to_vmem [thread:$0]  %s36, 32, %s38, [#allocation6]
    $region9: #{tpu_custom_call.1} parent=1 // pred_fallthru
      _
    // Predicated region
    $region10: #{tpu_custom_call.1} parent=1 // pred_check
      _
    $region11: #{tpu_custom_call.1} parent=1 // pred_check_branch
      %42 = sbr.rel (0) target = $region13
    $region12: #{tpu_custom_call.1} parent=1 // pred_region
      %44 = vsyncadd [#allocation6], 0
      %s45 = sshll.u32 %s2, 4
      %s46 = int_to_ptr.hbm [resolvable:$true] %s45
      %s47 = sshll.u32 [#allocation7], 4
      %s48 = int_to_ptr.vmem [resolvable:$true] %s47
      %53 = dma.hbm_to_vmem [thread:$0]  %s46, 32768, %s48, [#allocation6], 256, 256, 16
    $region13: #{tpu_custom_call.1} parent=1 // pred_fallthru
      _
    // Predicated region
    $region14: #{tpu_custom_call.1} parent=1 // pred_check
      _
    $region15: #{tpu_custom_call.1} parent=1 // pred_check_branch
      %55 = sbr.rel (0) target = $region17
    $region16: #{tpu_custom_call.1} parent=1 // pred_region
      %57 = vsyncadd [#allocation9], 0
      %s59 = sshll.u32 %s3, 4
      %s60 = int_to_ptr.hbm [resolvable:$true] %s59
      %s61 = sshll.u32 [#allocation8], 4
      %s62 = int_to_ptr.vmem [resolvable:$true] %s61
      %64 = dma.hbm_to_vmem [thread:$0]  %s60, 256, %s62, [#allocation9]
    $region17: #{tpu_custom_call.1} parent=1 // pred_fallthru
      _
    // Predicated region
    $region18: #{tpu_custom_call.1} parent=1 // pred_check
      _
    $region19: #{tpu_custom_call.1} parent=1 // pred_check_branch
      %66 = sbr.rel (0) target = $region21
    $region20: #{tpu_custom_call.1} parent=1 // pred_region
      _
    $region21: #{tpu_custom_call.1} parent=1 // pred_fallthru
      _
    // Predicated region
    $region22: #{tpu_custom_call.1} parent=1 // pred_check
      _
    $region23: #{tpu_custom_call.1} parent=1 // pred_check_branch
      %68 = sbr.rel (0) target = $region25
    $region24: #{tpu_custom_call.1} parent=1 // pred_region
      %70 = vsyncadd [#allocation9], 0
      %s71 = sshll.u32 %s5, 4
      %s72 = int_to_ptr.hbm [resolvable:$true] %s71
      %s73 = sshll.u32 [#allocation10], 4
      %s74 = int_to_ptr.vmem [resolvable:$true] %s73
      %79 = dma.hbm_to_vmem [thread:$0]  %s72, 8192, %s74, [#allocation9], 128, 128, 8
    $region25: #{tpu_custom_call.1} parent=1 // pred_fallthru
      _
    // Predicated region
    $region26: #{tpu_custom_call.1} parent=1 // pred_check
      _
    $region27: #{tpu_custom_call.1} parent=1 // pred_check_branch
      %81 = sbr.rel (0) target = $region29
    $region28: #{tpu_custom_call.1} parent=1 // pred_region
      _
    $region29: #{tpu_custom_call.1} parent=1 // pred_fallthru
      _
    // Predicated region
    $region30: #{tpu_custom_call.1} parent=1 // pred_check
      _
    $region31: #{tpu_custom_call.1} parent=1 // pred_check_branch
      %83 = sbr.rel (0) target = $region33
    $region32: #{tpu_custom_call.1} parent=1 // pred_region
      _
    $region33: #{tpu_custom_call.1} parent=1 // pred_fallthru
      _
    // Predicated region
    $region34: #{tpu_custom_call.1} parent=1 // pred_check
      _
    $region35: #{tpu_custom_call.1} parent=1 // pred_check_branch
      %85 = sbr.rel (0) target = $region37
    $region36: #{tpu_custom_call.1} parent=1 // pred_region
      _
    $region37: #{tpu_custom_call.1} parent=1 // pred_fallthru
      _
    // Predicated region
    $region38: #{tpu_custom_call.1} parent=1 // pred_check
      _
    $region39: #{tpu_custom_call.1} parent=1 // pred_check_branch
      %87 = sbr.rel (0) target = $region41
    $region40: #{tpu_custom_call.1} parent=1 // pred_region
      %89 = dma.done [#allocation4], 128
    $region41: #{tpu_custom_call.1} parent=1 // pred_fallthru
      _
    // Predicated region
    $region42: #{tpu_custom_call.1} parent=1 // pred_check
      _
    $region43: #{tpu_custom_call.1} parent=1 // pred_check_branch
      %91 = sbr.rel (0) target = $region45
    $region44: #{tpu_custom_call.1} parent=1 // pred_region
      %93 = dma.done [#allocation6], 32
    $region45: #{tpu_custom_call.1} parent=1 // pred_fallthru
      _
    // Predicated region
    $region46: #{tpu_custom_call.1} parent=1 // pred_check
      _
    $region47: #{tpu_custom_call.1} parent=1 // pred_check_branch
      %95 = sbr.rel (0) target = $region49
    $region48: #{tpu_custom_call.1} parent=1 // pred_region
      %97 = dma.done [#allocation6], 32768
    $region49: #{tpu_custom_call.1} parent=1 // pred_fallthru
      _
    // Predicated region
    $region50: #{tpu_custom_call.1} parent=1 // pred_check
      _
    $region51: #{tpu_custom_call.1} parent=1 // pred_check_branch
      %99 = sbr.rel (0) target = $region53
    $region52: #{tpu_custom_call.1} parent=1 // pred_region
      %101 = dma.done [#allocation9], 256
    $region53: #{tpu_custom_call.1} parent=1 // pred_fallthru
      _
    // Predicated region
    $region54: #{tpu_custom_call.1} parent=1 // pred_check
      _
    $region55: #{tpu_custom_call.1} parent=1 // pred_check_branch
      %103 = sbr.rel (0) target = $region57
    $region56: #{tpu_custom_call.1} parent=1 // pred_region
      %105 = dma.done [#allocation9], 8192
    $region57: #{tpu_custom_call.1} parent=1 // pred_fallthru
      _
    %v107 = vld [vmem:[#allocation3] sm:$0xff]
    %v108 = vld [vmem:[#allocation7] sm:$0xff]
    %v109 = vld [vmem:[#allocation7 + $0x8] sm:$0xff]
    %v110 = vld [vmem:[#allocation7 + $0x10] sm:$0xff]
    %v111 = vld [vmem:[#allocation7 + $0x18] sm:$0xff]
    %v112 = vld [vmem:[#allocation7 + $0x20] sm:$0xff]
    %v113 = vld [vmem:[#allocation7 + $0x28] sm:$0xff]
    %v114 = vld [vmem:[#allocation7 + $0x30] sm:$0xff]
    %v115 = vld [vmem:[#allocation7 + $0x38] sm:$0xff]
    %v116 = vld [vmem:[#allocation7 + $0x40] sm:$0xff]
    %v117 = vld [vmem:[#allocation7 + $0x48] sm:$0xff]
    %v118 = vld [vmem:[#allocation7 + $0x50] sm:$0xff]
    %v119 = vld [vmem:[#allocation7 + $0x58] sm:$0xff]
    %v120 = vld [vmem:[#allocation7 + $0x60] sm:$0xff]
    %v121 = vld [vmem:[#allocation7 + $0x68] sm:$0xff]
    %v122 = vld [vmem:[#allocation7 + $0x70] sm:$0xff]
    %v123 = vld [vmem:[#allocation7 + $0x78] sm:$0xff]
    %v124 = vld [vmem:[#allocation7 + $0x80] sm:$0xff]
    %v125 = vld [vmem:[#allocation7 + $0x88] sm:$0xff]
    %v126 = vld [vmem:[#allocation7 + $0x90] sm:$0xff]
    %v127 = vld [vmem:[#allocation7 + $0x98] sm:$0xff]
    %v128 = vld [vmem:[#allocation7 + $0xa0] sm:$0xff]
    %v129 = vld [vmem:[#allocation7 + $0xa8] sm:$0xff]
    %v130 = vld [vmem:[#allocation7 + $0xb0] sm:$0xff]
    %v131 = vld [vmem:[#allocation7 + $0xb8] sm:$0xff]
    %v132 = vld [vmem:[#allocation7 + $0xc0] sm:$0xff]
    %v133 = vld [vmem:[#allocation7 + $0xc8] sm:$0xff]
    %v134 = vld [vmem:[#allocation7 + $0xd0] sm:$0xff]
    %v135 = vld [vmem:[#allocation7 + $0xd8] sm:$0xff]
    %v136 = vld [vmem:[#allocation7 + $0xe0] sm:$0xff]
    %v137 = vld [vmem:[#allocation7 + $0xe8] sm:$0xff]
    %v138 = vld [vmem:[#allocation7 + $0xf0] sm:$0xff]
    %v139 = vld [vmem:[#allocation7 + $0xf8] sm:$0xff]
    %v140 = vld [vmem:[#allocation7 + $0x100] sm:$0xff]
    %v141 = vld [vmem:[#allocation7 + $0x108] sm:$0xff]
    %v142 = vld [vmem:[#allocation7 + $0x110] sm:$0xff]
    %v143 = vld [vmem:[#allocation7 + $0x118] sm:$0xff]
    %v144 = vld [vmem:[#allocation7 + $0x120] sm:$0xff]
    %v145 = vld [vmem:[#allocation7 + $0x128] sm:$0xff]
    %v146 = vld [vmem:[#allocation7 + $0x130] sm:$0xff]
    %v147 = vld [vmem:[#allocation7 + $0x138] sm:$0xff]
    %v148 = vld [vmem:[#allocation7 + $0x140] sm:$0xff]
    %v149 = vld [vmem:[#allocation7 + $0x148] sm:$0xff]
    %v150 = vld [vmem:[#allocation7 + $0x150] sm:$0xff]
    %v151 = vld [vmem:[#allocation7 + $0x158] sm:$0xff]
    %v152 = vld [vmem:[#allocation7 + $0x160] sm:$0xff]
    %v153 = vld [vmem:[#allocation7 + $0x168] sm:$0xff]
    %v154 = vld [vmem:[#allocation7 + $0x170] sm:$0xff]
    %v155 = vld [vmem:[#allocation7 + $0x178] sm:$0xff]
    %v156 = vld [vmem:[#allocation7 + $0x180] sm:$0xff]
    %v157 = vld [vmem:[#allocation7 + $0x188] sm:$0xff]
    %v158 = vld [vmem:[#allocation7 + $0x190] sm:$0xff]
    %v159 = vld [vmem:[#allocation7 + $0x198] sm:$0xff]
    %v160 = vld [vmem:[#allocation7 + $0x1a0] sm:$0xff]
    %v161 = vld [vmem:[#allocation7 + $0x1a8] sm:$0xff]
    %v162 = vld [vmem:[#allocation7 + $0x1b0] sm:$0xff]
    %v163 = vld [vmem:[#allocation7 + $0x1b8] sm:$0xff]
    %v164 = vld [vmem:[#allocation7 + $0x1c0] sm:$0xff]
    %v165 = vld [vmem:[#allocation7 + $0x1c8] sm:$0xff]
    %v166 = vld [vmem:[#allocation7 + $0x1d0] sm:$0xff]
    %v167 = vld [vmem:[#allocation7 + $0x1d8] sm:$0xff]
    %v168 = vld [vmem:[#allocation7 + $0x1e0] sm:$0xff]
    %v169 = vld [vmem:[#allocation7 + $0x1e8] sm:$0xff]
    %v170 = vld [vmem:[#allocation7 + $0x1f0] sm:$0xff]
    %v171 = vld [vmem:[#allocation7 + $0x1f8] sm:$0xff]
    %v172 = vld [vmem:[#allocation7 + $0x200] sm:$0xff]
    %v173 = vld [vmem:[#allocation7 + $0x208] sm:$0xff]
    %v174 = vld [vmem:[#allocation7 + $0x210] sm:$0xff]
    %v175 = vld [vmem:[#allocation7 + $0x218] sm:$0xff]
    %v176 = vld [vmem:[#allocation7 + $0x220] sm:$0xff]
    %v177 = vld [vmem:[#allocation7 + $0x228] sm:$0xff]
    %v178 = vld [vmem:[#allocation7 + $0x230] sm:$0xff]
    %v179 = vld [vmem:[#allocation7 + $0x238] sm:$0xff]
    %v180 = vld [vmem:[#allocation7 + $0x240] sm:$0xff]
    %v181 = vld [vmem:[#allocation7 + $0x248] sm:$0xff]
    %v182 = vld [vmem:[#allocation7 + $0x250] sm:$0xff]
    %v183 = vld [vmem:[#allocation7 + $0x258] sm:$0xff]
    %v184 = vld [vmem:[#allocation7 + $0x260] sm:$0xff]
    %v185 = vld [vmem:[#allocation7 + $0x268] sm:$0xff]
    %v186 = vld [vmem:[#allocation7 + $0x270] sm:$0xff]
    %v187 = vld [vmem:[#allocation7 + $0x278] sm:$0xff]
    %v188 = vld [vmem:[#allocation7 + $0x280] sm:$0xff]
    %v189 = vld [vmem:[#allocation7 + $0x288] sm:$0xff]
    %v190 = vld [vmem:[#allocation7 + $0x290] sm:$0xff]
    %v191 = vld [vmem:[#allocation7 + $0x298] sm:$0xff]
    %v192 = vld [vmem:[#allocation7 + $0x2a0] sm:$0xff]
    %v193 = vld [vmem:[#allocation7 + $0x2a8] sm:$0xff]
    %v194 = vld [vmem:[#allocation7 + $0x2b0] sm:$0xff]
    %v195 = vld [vmem:[#allocation7 + $0x2b8] sm:$0xff]
    %v196 = vld [vmem:[#allocation7 + $0x2c0] sm:$0xff]
    %v197 = vld [vmem:[#allocation7 + $0x2c8] sm:$0xff]
    %v198 = vld [vmem:[#allocation7 + $0x2d0] sm:$0xff]
    %v199 = vld [vmem:[#allocation7 + $0x2d8] sm:$0xff]
    %v200 = vld [vmem:[#allocation7 + $0x2e0] sm:$0xff]
    %v201 = vld [vmem:[#allocation7 + $0x2e8] sm:$0xff]
    %v202 = vld [vmem:[#allocation7 + $0x2f0] sm:$0xff]
    %v203 = vld [vmem:[#allocation7 + $0x2f8] sm:$0xff]
    %v204 = vld [vmem:[#allocation7 + $0x300] sm:$0xff]
    %v205 = vld [vmem:[#allocation7 + $0x308] sm:$0xff]
    %v206 = vld [vmem:[#allocation7 + $0x310] sm:$0xff]
    %v207 = vld [vmem:[#allocation7 + $0x318] sm:$0xff]
    %v208 = vld [vmem:[#allocation7 + $0x320] sm:$0xff]
    %v209 = vld [vmem:[#allocation7 + $0x328] sm:$0xff]
    %v210 = vld [vmem:[#allocation7 + $0x330] sm:$0xff]
    %v211 = vld [vmem:[#allocation7 + $0x338] sm:$0xff]
    %v212 = vld [vmem:[#allocation7 + $0x340] sm:$0xff]
    %v213 = vld [vmem:[#allocation7 + $0x348] sm:$0xff]
    %v214 = vld [vmem:[#allocation7 + $0x350] sm:$0xff]
    %v215 = vld [vmem:[#allocation7 + $0x358] sm:$0xff]
    %v216 = vld [vmem:[#allocation7 + $0x360] sm:$0xff]
    %v217 = vld [vmem:[#allocation7 + $0x368] sm:$0xff]
    %v218 = vld [vmem:[#allocation7 + $0x370] sm:$0xff]
    %v219 = vld [vmem:[#allocation7 + $0x378] sm:$0xff]
    %v220 = vld [vmem:[#allocation7 + $0x380] sm:$0xff]
    %v221 = vld [vmem:[#allocation7 + $0x388] sm:$0xff]
    %v222 = vld [vmem:[#allocation7 + $0x390] sm:$0xff]
    %v223 = vld [vmem:[#allocation7 + $0x398] sm:$0xff]
    %v224 = vld [vmem:[#allocation7 + $0x3a0] sm:$0xff]
    %v225 = vld [vmem:[#allocation7 + $0x3a8] sm:$0xff]
    %v226 = vld [vmem:[#allocation7 + $0x3b0] sm:$0xff]
    %v227 = vld [vmem:[#allocation7 + $0x3b8] sm:$0xff]
    %v228 = vld [vmem:[#allocation7 + $0x3c0] sm:$0xff]
    %v229 = vld [vmem:[#allocation7 + $0x3c8] sm:$0xff]
    %v230 = vld [vmem:[#allocation7 + $0x3d0] sm:$0xff]
    %v231 = vld [vmem:[#allocation7 + $0x3d8] sm:$0xff]
    %v232 = vld [vmem:[#allocation7 + $0x3e0] sm:$0xff]
    %v233 = vld [vmem:[#allocation7 + $0x3e8] sm:$0xff]
    %v234 = vld [vmem:[#allocation7 + $0x3f0] sm:$0xff]
    %v235 = vld [vmem:[#allocation7 + $0x3f8] sm:$0xff]
    %v236 = vld [vmem:[#allocation7 + $0x400] sm:$0xff]
    %v237 = vld [vmem:[#allocation7 + $0x408] sm:$0xff]
    %v238 = vld [vmem:[#allocation7 + $0x410] sm:$0xff]
    %v239 = vld [vmem:[#allocation7 + $0x418] sm:$0xff]
    %v240 = vld [vmem:[#allocation7 + $0x420] sm:$0xff]
    %v241 = vld [vmem:[#allocation7 + $0x428] sm:$0xff]
    %v242 = vld [vmem:[#allocation7 + $0x430] sm:$0xff]
    %v243 = vld [vmem:[#allocation7 + $0x438] sm:$0xff]
    %v244 = vld [vmem:[#allocation7 + $0x440] sm:$0xff]
    %v245 = vld [vmem:[#allocation7 + $0x448] sm:$0xff]
    %v246 = vld [vmem:[#allocation7 + $0x450] sm:$0xff]
    %v247 = vld [vmem:[#allocation7 + $0x458] sm:$0xff]
    %v248 = vld [vmem:[#allocation7 + $0x460] sm:$0xff]
    %v249 = vld [vmem:[#allocation7 + $0x468] sm:$0xff]
    %v250 = vld [vmem:[#allocation7 + $0x470] sm:$0xff]
    %v251 = vld [vmem:[#allocation7 + $0x478] sm:$0xff]
    %v252 = vld [vmem:[#allocation7 + $0x480] sm:$0xff]
    %v253 = vld [vmem:[#allocation7 + $0x488] sm:$0xff]
    %v254 = vld [vmem:[#allocation7 + $0x490] sm:$0xff]
    %v255 = vld [vmem:[#allocation7 + $0x498] sm:$0xff]
    %v256 = vld [vmem:[#allocation7 + $0x4a0] sm:$0xff]
    %v257 = vld [vmem:[#allocation7 + $0x4a8] sm:$0xff]
    %v258 = vld [vmem:[#allocation7 + $0x4b0] sm:$0xff]
    %v259 = vld [vmem:[#allocation7 + $0x4b8] sm:$0xff]
    %v260 = vld [vmem:[#allocation7 + $0x4c0] sm:$0xff]
    %v261 = vld [vmem:[#allocation7 + $0x4c8] sm:$0xff]
    %v262 = vld [vmem:[#allocation7 + $0x4d0] sm:$0xff]
    %v263 = vld [vmem:[#allocation7 + $0x4d8] sm:$0xff]
    %v264 = vld [vmem:[#allocation7 + $0x4e0] sm:$0xff]
    %v265 = vld [vmem:[#allocation7 + $0x4e8] sm:$0xff]
    %v266 = vld [vmem:[#allocation7 + $0x4f0] sm:$0xff]
    %v267 = vld [vmem:[#allocation7 + $0x4f8] sm:$0xff]
    %v268 = vld [vmem:[#allocation7 + $0x500] sm:$0xff]
    %v269 = vld [vmem:[#allocation7 + $0x508] sm:$0xff]
    %v270 = vld [vmem:[#allocation7 + $0x510] sm:$0xff]
    %v271 = vld [vmem:[#allocation7 + $0x518] sm:$0xff]
    %v272 = vld [vmem:[#allocation7 + $0x520] sm:$0xff]
    %v273 = vld [vmem:[#allocation7 + $0x528] sm:$0xff]
    %v274 = vld [vmem:[#allocation7 + $0x530] sm:$0xff]
    %v275 = vld [vmem:[#allocation7 + $0x538] sm:$0xff]
    %v276 = vld [vmem:[#allocation7 + $0x540] sm:$0xff]
    %v277 = vld [vmem:[#allocation7 + $0x548] sm:$0xff]
    %v278 = vld [vmem:[#allocation7 + $0x550] sm:$0xff]
    %v279 = vld [vmem:[#allocation7 + $0x558] sm:$0xff]
    %v280 = vld [vmem:[#allocation7 + $0x560] sm:$0xff]
    %v281 = vld [vmem:[#allocation7 + $0x568] sm:$0xff]
    %v282 = vld [vmem:[#allocation7 + $0x570] sm:$0xff]
    %v283 = vld [vmem:[#allocation7 + $0x578] sm:$0xff]
    %v284 = vld [vmem:[#allocation7 + $0x580] sm:$0xff]
    %v285 = vld [vmem:[#allocation7 + $0x588] sm:$0xff]
    %v286 = vld [vmem:[#allocation7 + $0x590] sm:$0xff]
    %v287 = vld [vmem:[#allocation7 + $0x598] sm:$0xff]
    %v288 = vld [vmem:[#allocation7 + $0x5a0] sm:$0xff]
    %v289 = vld [vmem:[#allocation7 + $0x5a8] sm:$0xff]
    %v290 = vld [vmem:[#allocation7 + $0x5b0] sm:$0xff]
    %v291 = vld [vmem:[#allocation7 + $0x5b8] sm:$0xff]
    %v292 = vld [vmem:[#allocation7 + $0x5c0] sm:$0xff]
    %v293 = vld [vmem:[#allocation7 + $0x5c8] sm:$0xff]
    %v294 = vld [vmem:[#allocation7 + $0x5d0] sm:$0xff]
    %v295 = vld [vmem:[#allocation7 + $0x5d8] sm:$0xff]
    %v296 = vld [vmem:[#allocation7 + $0x5e0] sm:$0xff]
    %v297 = vld [vmem:[#allocation7 + $0x5e8] sm:$0xff]
    %v298 = vld [vmem:[#allocation7 + $0x5f0] sm:$0xff]
    %v299 = vld [vmem:[#allocation7 + $0x5f8] sm:$0xff]
    %v300 = vld [vmem:[#allocation7 + $0x600] sm:$0xff]
    %v301 = vld [vmem:[#allocation7 + $0x608] sm:$0xff]
    %v302 = vld [vmem:[#allocation7 + $0x610] sm:$0xff]
    %v303 = vld [vmem:[#allocation7 + $0x618] sm:$0xff]
    %v304 = vld [vmem:[#allocation7 + $0x620] sm:$0xff]
    %v305 = vld [vmem:[#allocation7 + $0x628] sm:$0xff]
    %v306 = vld [vmem:[#allocation7 + $0x630] sm:$0xff]
    %v307 = vld [vmem:[#allocation7 + $0x638] sm:$0xff]
    %v308 = vld [vmem:[#allocation7 + $0x640] sm:$0xff]
    %v309 = vld [vmem:[#allocation7 + $0x648] sm:$0xff]
    %v310 = vld [vmem:[#allocation7 + $0x650] sm:$0xff]
    %v311 = vld [vmem:[#allocation7 + $0x658] sm:$0xff]
    %v312 = vld [vmem:[#allocation7 + $0x660] sm:$0xff]
    %v313 = vld [vmem:[#allocation7 + $0x668] sm:$0xff]
    %v314 = vld [vmem:[#allocation7 + $0x670] sm:$0xff]
    %v315 = vld [vmem:[#allocation7 + $0x678] sm:$0xff]
    %v316 = vld [vmem:[#allocation7 + $0x680] sm:$0xff]
    %v317 = vld [vmem:[#allocation7 + $0x688] sm:$0xff]
    %v318 = vld [vmem:[#allocation7 + $0x690] sm:$0xff]
    %v319 = vld [vmem:[#allocation7 + $0x698] sm:$0xff]
    %v320 = vld [vmem:[#allocation7 + $0x6a0] sm:$0xff]
    %v321 = vld [vmem:[#allocation7 + $0x6a8] sm:$0xff]
    %v322 = vld [vmem:[#allocation7 + $0x6b0] sm:$0xff]
    %v323 = vld [vmem:[#allocation7 + $0x6b8] sm:$0xff]
    %v324 = vld [vmem:[#allocation7 + $0x6c0] sm:$0xff]
    %v325 = vld [vmem:[#allocation7 + $0x6c8] sm:$0xff]
    %v326 = vld [vmem:[#allocation7 + $0x6d0] sm:$0xff]
    %v327 = vld [vmem:[#allocation7 + $0x6d8] sm:$0xff]
    %v328 = vld [vmem:[#allocation7 + $0x6e0] sm:$0xff]
    %v329 = vld [vmem:[#allocation7 + $0x6e8] sm:$0xff]
    %v330 = vld [vmem:[#allocation7 + $0x6f0] sm:$0xff]
    %v331 = vld [vmem:[#allocation7 + $0x6f8] sm:$0xff]
    %v332 = vld [vmem:[#allocation7 + $0x700] sm:$0xff]
    %v333 = vld [vmem:[#allocation7 + $0x708] sm:$0xff]
    %v334 = vld [vmem:[#allocation7 + $0x710] sm:$0xff]
    %v335 = vld [vmem:[#allocation7 + $0x718] sm:$0xff]
    %v336 = vld [vmem:[#allocation7 + $0x720] sm:$0xff]
    %v337 = vld [vmem:[#allocation7 + $0x728] sm:$0xff]
    %v338 = vld [vmem:[#allocation7 + $0x730] sm:$0xff]
    %v339 = vld [vmem:[#allocation7 + $0x738] sm:$0xff]
    %v340 = vld [vmem:[#allocation7 + $0x740] sm:$0xff]
    %v341 = vld [vmem:[#allocation7 + $0x748] sm:$0xff]
    %v342 = vld [vmem:[#allocation7 + $0x750] sm:$0xff]
    %v343 = vld [vmem:[#allocation7 + $0x758] sm:$0xff]
    %v344 = vld [vmem:[#allocation7 + $0x760] sm:$0xff]
    %v345 = vld [vmem:[#allocation7 + $0x768] sm:$0xff]
    %v346 = vld [vmem:[#allocation7 + $0x770] sm:$0xff]
    %v347 = vld [vmem:[#allocation7 + $0x778] sm:$0xff]
    %v348 = vld [vmem:[#allocation7 + $0x780] sm:$0xff]
    %v349 = vld [vmem:[#allocation7 + $0x788] sm:$0xff]
    %v350 = vld [vmem:[#allocation7 + $0x790] sm:$0xff]
    %v351 = vld [vmem:[#allocation7 + $0x798] sm:$0xff]
    %v352 = vld [vmem:[#allocation7 + $0x7a0] sm:$0xff]
    %v353 = vld [vmem:[#allocation7 + $0x7a8] sm:$0xff]
    %v354 = vld [vmem:[#allocation7 + $0x7b0] sm:$0xff]
    %v355 = vld [vmem:[#allocation7 + $0x7b8] sm:$0xff]
    %v356 = vld [vmem:[#allocation7 + $0x7c0] sm:$0xff]
    %v357 = vld [vmem:[#allocation7 + $0x7c8] sm:$0xff]
    %v358 = vld [vmem:[#allocation7 + $0x7d0] sm:$0xff]
    %v359 = vld [vmem:[#allocation7 + $0x7d8] sm:$0xff]
    %v360 = vld [vmem:[#allocation7 + $0x7e0] sm:$0xff]
    %v361 = vld [vmem:[#allocation7 + $0x7e8] sm:$0xff]
    %v362 = vld [vmem:[#allocation7 + $0x7f0] sm:$0xff]
    %v363 = vld [vmem:[#allocation7 + $0x7f8] sm:$0xff]
    %v364 = vld [vmem:[%s4] sm:$0xf]
    %v366 = vperm.slane %v364, 0
    %v367 = vperm.slane %v364, 1
    %v368 = vperm.slane %v364, 2
    %v369 = vperm.slane %v364, 3
    %375 = vst [vmem:[#allocation1] ss:$9 sm:$0xff] %v107
    %v376 = vld [vmem:[#allocation1] sm:$0xff]
    %v377 = vld [vmem:[#allocation1 + $0x9] sm:$0xff]
    %v378 = vld [vmem:[#allocation1 + $0x12] sm:$0xff]
    %v379 = vld [vmem:[#allocation1 + $0x1b] sm:$0xff]
    %v380 = vld [vmem:[#allocation1 + $0x24] sm:$0xff]
    %v381 = vld [vmem:[#allocation1 + $0x2d] sm:$0xff]
    %v382 = vld [vmem:[#allocation1 + $0x36] sm:$0xff]
    %v383 = vld [vmem:[#allocation1 + $0x3f] sm:$0xff]
    %v648 = vunpack.c.l.b16 %v108
    %v649 = vunpack.c.h.b16 %v108
    %v650 = vunpack.c.l.b16 %v109
    %v651 = vunpack.c.h.b16 %v109
    %v652 = vunpack.c.l.b16 %v110
    %v653 = vunpack.c.h.b16 %v110
    %v654 = vunpack.c.l.b16 %v111
    %v655 = vunpack.c.h.b16 %v111
    %v656 = vunpack.c.l.b16 %v112
    %v657 = vunpack.c.h.b16 %v112
    %v658 = vunpack.c.l.b16 %v113
    %v659 = vunpack.c.h.b16 %v113
    %v660 = vunpack.c.l.b16 %v114
    %v661 = vunpack.c.h.b16 %v114
    %v662 = vunpack.c.l.b16 %v115
    %v663 = vunpack.c.h.b16 %v115
    %v664 = vunpack.c.l.b16 %v116
    %v665 = vunpack.c.h.b16 %v116
    %v666 = vunpack.c.l.b16 %v117
    %v667 = vunpack.c.h.b16 %v117
    %v668 = vunpack.c.l.b16 %v118
    %v669 = vunpack.c.h.b16 %v118
    %v670 = vunpack.c.l.b16 %v119
    %v671 = vunpack.c.h.b16 %v119
    %v672 = vunpack.c.l.b16 %v120
    %v673 = vunpack.c.h.b16 %v120
    %v674 = vunpack.c.l.b16 %v121
    %v675 = vunpack.c.h.b16 %v121
    %v676 = vunpack.c.l.b16 %v122
    %v677 = vunpack.c.h.b16 %v122
    %v678 = vunpack.c.l.b16 %v123
    %v679 = vunpack.c.h.b16 %v123
    %v680 = vunpack.c.l.b16 %v124
    %v681 = vunpack.c.h.b16 %v124
    %v682 = vunpack.c.l.b16 %v125
    %v683 = vunpack.c.h.b16 %v125
    %v684 = vunpack.c.l.b16 %v126
    %v685 = vunpack.c.h.b16 %v126
    %v686 = vunpack.c.l.b16 %v127
    %v687 = vunpack.c.h.b16 %v127
    %v688 = vunpack.c.l.b16 %v128
    %v689 = vunpack.c.h.b16 %v128
    %v690 = vunpack.c.l.b16 %v129
    %v691 = vunpack.c.h.b16 %v129
    %v692 = vunpack.c.l.b16 %v130
    %v693 = vunpack.c.h.b16 %v130
    %v694 = vunpack.c.l.b16 %v131
    %v695 = vunpack.c.h.b16 %v131
    %v696 = vunpack.c.l.b16 %v132
    %v697 = vunpack.c.h.b16 %v132
    %v698 = vunpack.c.l.b16 %v133
    %v699 = vunpack.c.h.b16 %v133
    %v700 = vunpack.c.l.b16 %v134
    %v701 = vunpack.c.h.b16 %v134
    %v702 = vunpack.c.l.b16 %v135
    %v703 = vunpack.c.h.b16 %v135
    %v704 = vunpack.c.l.b16 %v136
    %v705 = vunpack.c.h.b16 %v136
    %v706 = vunpack.c.l.b16 %v137
    %v707 = vunpack.c.h.b16 %v137
    %v708 = vunpack.c.l.b16 %v138
    %v709 = vunpack.c.h.b16 %v138
    %v710 = vunpack.c.l.b16 %v139
    %v711 = vunpack.c.h.b16 %v139
    %v712 = vunpack.c.l.b16 %v140
    %v713 = vunpack.c.h.b16 %v140
    %v714 = vunpack.c.l.b16 %v141
    %v715 = vunpack.c.h.b16 %v141
    %v716 = vunpack.c.l.b16 %v142
    %v717 = vunpack.c.h.b16 %v142
    %v718 = vunpack.c.l.b16 %v143
    %v719 = vunpack.c.h.b16 %v143
    %v720 = vunpack.c.l.b16 %v144
    %v721 = vunpack.c.h.b16 %v144
    %v722 = vunpack.c.l.b16 %v145
    %v723 = vunpack.c.h.b16 %v145
    %v724 = vunpack.c.l.b16 %v146
    %v725 = vunpack.c.h.b16 %v146
    %v726 = vunpack.c.l.b16 %v147
    %v727 = vunpack.c.h.b16 %v147
    %v728 = vunpack.c.l.b16 %v148
    %v729 = vunpack.c.h.b16 %v148
    %v730 = vunpack.c.l.b16 %v149
    %v731 = vunpack.c.h.b16 %v149
    %v732 = vunpack.c.l.b16 %v150
    %v733 = vunpack.c.h.b16 %v150
    %v734 = vunpack.c.l.b16 %v151
    %v735 = vunpack.c.h.b16 %v151
    %v736 = vunpack.c.l.b16 %v152
    %v737 = vunpack.c.h.b16 %v152
    %v738 = vunpack.c.l.b16 %v153
    %v739 = vunpack.c.h.b16 %v153
    %v740 = vunpack.c.l.b16 %v154
    %v741 = vunpack.c.h.b16 %v154
    %v742 = vunpack.c.l.b16 %v155
    %v743 = vunpack.c.h.b16 %v155
    %v744 = vunpack.c.l.b16 %v156
    %v745 = vunpack.c.h.b16 %v156
    %v746 = vunpack.c.l.b16 %v157
    %v747 = vunpack.c.h.b16 %v157
    %v748 = vunpack.c.l.b16 %v158
    %v749 = vunpack.c.h.b16 %v158
    %v750 = vunpack.c.l.b16 %v159
    %v751 = vunpack.c.h.b16 %v159
    %v752 = vunpack.c.l.b16 %v160
    %v753 = vunpack.c.h.b16 %v160
    %v754 = vunpack.c.l.b16 %v161
    %v755 = vunpack.c.h.b16 %v161
    %v756 = vunpack.c.l.b16 %v162
    %v757 = vunpack.c.h.b16 %v162
    %v758 = vunpack.c.l.b16 %v163
    %v759 = vunpack.c.h.b16 %v163
    %v760 = vunpack.c.l.b16 %v164
    %v761 = vunpack.c.h.b16 %v164
    %v762 = vunpack.c.l.b16 %v165
    %v763 = vunpack.c.h.b16 %v165
    %v764 = vunpack.c.l.b16 %v166
    %v765 = vunpack.c.h.b16 %v166
    %v766 = vunpack.c.l.b16 %v167
    %v767 = vunpack.c.h.b16 %v167
    %v768 = vunpack.c.l.b16 %v168
    %v769 = vunpack.c.h.b16 %v168
    %v770 = vunpack.c.l.b16 %v169
    %v771 = vunpack.c.h.b16 %v169
    %v772 = vunpack.c.l.b16 %v170
    %v773 = vunpack.c.h.b16 %v170
    %v774 = vunpack.c.l.b16 %v171
    %v775 = vunpack.c.h.b16 %v171
    %v776 = vunpack.c.l.b16 %v172
    %v777 = vunpack.c.h.b16 %v172
    %v778 = vunpack.c.l.b16 %v173
    %v779 = vunpack.c.h.b16 %v173
    %v780 = vunpack.c.l.b16 %v174
    %v781 = vunpack.c.h.b16 %v174
    %v782 = vunpack.c.l.b16 %v175
    %v783 = vunpack.c.h.b16 %v175
    %v784 = vunpack.c.l.b16 %v176
    %v785 = vunpack.c.h.b16 %v176
    %v786 = vunpack.c.l.b16 %v177
    %v787 = vunpack.c.h.b16 %v177
    %v788 = vunpack.c.l.b16 %v178
    %v789 = vunpack.c.h.b16 %v178
    %v790 = vunpack.c.l.b16 %v179
    %v791 = vunpack.c.h.b16 %v179
    %v792 = vunpack.c.l.b16 %v180
    %v793 = vunpack.c.h.b16 %v180
    %v794 = vunpack.c.l.b16 %v181
    %v795 = vunpack.c.h.b16 %v181
    %v796 = vunpack.c.l.b16 %v182
    %v797 = vunpack.c.h.b16 %v182
    %v798 = vunpack.c.l.b16 %v183
    %v799 = vunpack.c.h.b16 %v183
    %v800 = vunpack.c.l.b16 %v184
    %v801 = vunpack.c.h.b16 %v184
    %v802 = vunpack.c.l.b16 %v185
    %v803 = vunpack.c.h.b16 %v185
    %v804 = vunpack.c.l.b16 %v186
    %v805 = vunpack.c.h.b16 %v186
    %v806 = vunpack.c.l.b16 %v187
    %v807 = vunpack.c.h.b16 %v187
    %v808 = vunpack.c.l.b16 %v188
    %v809 = vunpack.c.h.b16 %v188
    %v810 = vunpack.c.l.b16 %v189
    %v811 = vunpack.c.h.b16 %v189
    %v812 = vunpack.c.l.b16 %v190
    %v813 = vunpack.c.h.b16 %v190
    %v814 = vunpack.c.l.b16 %v191
    %v815 = vunpack.c.h.b16 %v191
    %v816 = vunpack.c.l.b16 %v192
    %v817 = vunpack.c.h.b16 %v192
    %v818 = vunpack.c.l.b16 %v193
    %v819 = vunpack.c.h.b16 %v193
    %v820 = vunpack.c.l.b16 %v194
    %v821 = vunpack.c.h.b16 %v194
    %v822 = vunpack.c.l.b16 %v195
    %v823 = vunpack.c.h.b16 %v195
    %v824 = vunpack.c.l.b16 %v196
    %v825 = vunpack.c.h.b16 %v196
    %v826 = vunpack.c.l.b16 %v197
    %v827 = vunpack.c.h.b16 %v197
    %v828 = vunpack.c.l.b16 %v198
    %v829 = vunpack.c.h.b16 %v198
    %v830 = vunpack.c.l.b16 %v199
    %v831 = vunpack.c.h.b16 %v199
    %v832 = vunpack.c.l.b16 %v200
    %v833 = vunpack.c.h.b16 %v200
    %v834 = vunpack.c.l.b16 %v201
    %v835 = vunpack.c.h.b16 %v201
    %v836 = vunpack.c.l.b16 %v202
    %v837 = vunpack.c.h.b16 %v202
    %v838 = vunpack.c.l.b16 %v203
    %v839 = vunpack.c.h.b16 %v203
    %v840 = vunpack.c.l.b16 %v204
    %v841 = vunpack.c.h.b16 %v204
    %v842 = vunpack.c.l.b16 %v205
    %v843 = vunpack.c.h.b16 %v205
    %v844 = vunpack.c.l.b16 %v206
    %v845 = vunpack.c.h.b16 %v206
    %v846 = vunpack.c.l.b16 %v207
    %v847 = vunpack.c.h.b16 %v207
    %v848 = vunpack.c.l.b16 %v208
    %v849 = vunpack.c.h.b16 %v208
    %v850 = vunpack.c.l.b16 %v209
    %v851 = vunpack.c.h.b16 %v209
    %v852 = vunpack.c.l.b16 %v210
    %v853 = vunpack.c.h.b16 %v210
    %v854 = vunpack.c.l.b16 %v211
    %v855 = vunpack.c.h.b16 %v211
    %v856 = vunpack.c.l.b16 %v212
    %v857 = vunpack.c.h.b16 %v212
    %v858 = vunpack.c.l.b16 %v213
    %v859 = vunpack.c.h.b16 %v213
    %v860 = vunpack.c.l.b16 %v214
    %v861 = vunpack.c.h.b16 %v214
    %v862 = vunpack.c.l.b16 %v215
    %v863 = vunpack.c.h.b16 %v215
    %v864 = vunpack.c.l.b16 %v216
    %v865 = vunpack.c.h.b16 %v216
    %v866 = vunpack.c.l.b16 %v217
    %v867 = vunpack.c.h.b16 %v217
    %v868 = vunpack.c.l.b16 %v218
    %v869 = vunpack.c.h.b16 %v218
    %v870 = vunpack.c.l.b16 %v219
    %v871 = vunpack.c.h.b16 %v219
    %v872 = vunpack.c.l.b16 %v220
    %v873 = vunpack.c.h.b16 %v220
    %v874 = vunpack.c.l.b16 %v221
    %v875 = vunpack.c.h.b16 %v221
    %v876 = vunpack.c.l.b16 %v222
    %v877 = vunpack.c.h.b16 %v222
    %v878 = vunpack.c.l.b16 %v223
    %v879 = vunpack.c.h.b16 %v223
    %v880 = vunpack.c.l.b16 %v224
    %v881 = vunpack.c.h.b16 %v224
    %v882 = vunpack.c.l.b16 %v225
    %v883 = vunpack.c.h.b16 %v225
    %v884 = vunpack.c.l.b16 %v226
    %v885 = vunpack.c.h.b16 %v226
    %v886 = vunpack.c.l.b16 %v227
    %v887 = vunpack.c.h.b16 %v227
    %v888 = vunpack.c.l.b16 %v228
    %v889 = vunpack.c.h.b16 %v228
    %v890 = vunpack.c.l.b16 %v229
    %v891 = vunpack.c.h.b16 %v229
    %v892 = vunpack.c.l.b16 %v230
    %v893 = vunpack.c.h.b16 %v230
    %v894 = vunpack.c.l.b16 %v231
    %v895 = vunpack.c.h.b16 %v231
    %v896 = vunpack.c.l.b16 %v232
    %v897 = vunpack.c.h.b16 %v232
    %v898 = vunpack.c.l.b16 %v233
    %v899 = vunpack.c.h.b16 %v233
    %v900 = vunpack.c.l.b16 %v234
    %v901 = vunpack.c.h.b16 %v234
    %v902 = vunpack.c.l.b16 %v235
    %v903 = vunpack.c.h.b16 %v235
    %v904 = vunpack.c.l.b16 %v236
    %v905 = vunpack.c.h.b16 %v236
    %v906 = vunpack.c.l.b16 %v237
    %v907 = vunpack.c.h.b16 %v237
    %v908 = vunpack.c.l.b16 %v238
    %v909 = vunpack.c.h.b16 %v238
    %v910 = vunpack.c.l.b16 %v239
    %v911 = vunpack.c.h.b16 %v239
    %v912 = vunpack.c.l.b16 %v240
    %v913 = vunpack.c.h.b16 %v240
    %v914 = vunpack.c.l.b16 %v241
    %v915 = vunpack.c.h.b16 %v241
    %v916 = vunpack.c.l.b16 %v242
    %v917 = vunpack.c.h.b16 %v242
    %v918 = vunpack.c.l.b16 %v243
    %v919 = vunpack.c.h.b16 %v243
    %v920 = vunpack.c.l.b16 %v244
    %v921 = vunpack.c.h.b16 %v244
    %v922 = vunpack.c.l.b16 %v245
    %v923 = vunpack.c.h.b16 %v245
    %v924 = vunpack.c.l.b16 %v246
    %v925 = vunpack.c.h.b16 %v246
    %v926 = vunpack.c.l.b16 %v247
    %v927 = vunpack.c.h.b16 %v247
    %v928 = vunpack.c.l.b16 %v248
    %v929 = vunpack.c.h.b16 %v248
    %v930 = vunpack.c.l.b16 %v249
    %v931 = vunpack.c.h.b16 %v249
    %v932 = vunpack.c.l.b16 %v250
    %v933 = vunpack.c.h.b16 %v250
    %v934 = vunpack.c.l.b16 %v251
    %v935 = vunpack.c.h.b16 %v251
    %v936 = vunpack.c.l.b16 %v252
    %v937 = vunpack.c.h.b16 %v252
    %v938 = vunpack.c.l.b16 %v253
    %v939 = vunpack.c.h.b16 %v253
    %v940 = vunpack.c.l.b16 %v254
    %v941 = vunpack.c.h.b16 %v254
    %v942 = vunpack.c.l.b16 %v255
    %v943 = vunpack.c.h.b16 %v255
    %v944 = vunpack.c.l.b16 %v256
    %v945 = vunpack.c.h.b16 %v256
    %v946 = vunpack.c.l.b16 %v257
    %v947 = vunpack.c.h.b16 %v257
    %v948 = vunpack.c.l.b16 %v258
    %v949 = vunpack.c.h.b16 %v258
    %v950 = vunpack.c.l.b16 %v259
    %v951 = vunpack.c.h.b16 %v259
    %v952 = vunpack.c.l.b16 %v260
    %v953 = vunpack.c.h.b16 %v260
    %v954 = vunpack.c.l.b16 %v261
    %v955 = vunpack.c.h.b16 %v261
    %v956 = vunpack.c.l.b16 %v262
    %v957 = vunpack.c.h.b16 %v262
    %v958 = vunpack.c.l.b16 %v263
    %v959 = vunpack.c.h.b16 %v263
    %v960 = vunpack.c.l.b16 %v264
    %v961 = vunpack.c.h.b16 %v264
    %v962 = vunpack.c.l.b16 %v265
    %v963 = vunpack.c.h.b16 %v265
    %v964 = vunpack.c.l.b16 %v266
    %v965 = vunpack.c.h.b16 %v266
    %v966 = vunpack.c.l.b16 %v267
    %v967 = vunpack.c.h.b16 %v267
    %v968 = vunpack.c.l.b16 %v268
    %v969 = vunpack.c.h.b16 %v268
    %v970 = vunpack.c.l.b16 %v269
    %v971 = vunpack.c.h.b16 %v269
    %v972 = vunpack.c.l.b16 %v270
    %v973 = vunpack.c.h.b16 %v270
    %v974 = vunpack.c.l.b16 %v271
    %v975 = vunpack.c.h.b16 %v271
    %v976 = vunpack.c.l.b16 %v272
    %v977 = vunpack.c.h.b16 %v272
    %v978 = vunpack.c.l.b16 %v273
    %v979 = vunpack.c.h.b16 %v273
    %v980 = vunpack.c.l.b16 %v274
    %v981 = vunpack.c.h.b16 %v274
    %v982 = vunpack.c.l.b16 %v275
    %v983 = vunpack.c.h.b16 %v275
    %v984 = vunpack.c.l.b16 %v276
    %v985 = vunpack.c.h.b16 %v276
    %v986 = vunpack.c.l.b16 %v277
    %v987 = vunpack.c.h.b16 %v277
    %v988 = vunpack.c.l.b16 %v278
    %v989 = vunpack.c.h.b16 %v278
    %v990 = vunpack.c.l.b16 %v279
    %v991 = vunpack.c.h.b16 %v279
    %v992 = vunpack.c.l.b16 %v280
    %v993 = vunpack.c.h.b16 %v280
    %v994 = vunpack.c.l.b16 %v281
    %v995 = vunpack.c.h.b16 %v281
    %v996 = vunpack.c.l.b16 %v282
    %v997 = vunpack.c.h.b16 %v282
    %v998 = vunpack.c.l.b16 %v283
    %v999 = vunpack.c.h.b16 %v283
    %v1000 = vunpack.c.l.b16 %v284
    %v1001 = vunpack.c.h.b16 %v284
    %v1002 = vunpack.c.l.b16 %v285
    %v1003 = vunpack.c.h.b16 %v285
    %v1004 = vunpack.c.l.b16 %v286
    %v1005 = vunpack.c.h.b16 %v286
    %v1006 = vunpack.c.l.b16 %v287
    %v1007 = vunpack.c.h.b16 %v287
    %v1008 = vunpack.c.l.b16 %v288
    %v1009 = vunpack.c.h.b16 %v288
    %v1010 = vunpack.c.l.b16 %v289
    %v1011 = vunpack.c.h.b16 %v289
    %v1012 = vunpack.c.l.b16 %v290
    %v1013 = vunpack.c.h.b16 %v290
    %v1014 = vunpack.c.l.b16 %v291
    %v1015 = vunpack.c.h.b16 %v291
    %v1016 = vunpack.c.l.b16 %v292
    %v1017 = vunpack.c.h.b16 %v292
    %v1018 = vunpack.c.l.b16 %v293
    %v1019 = vunpack.c.h.b16 %v293
    %v1020 = vunpack.c.l.b16 %v294
    %v1021 = vunpack.c.h.b16 %v294
    %v1022 = vunpack.c.l.b16 %v295
    %v1023 = vunpack.c.h.b16 %v295
    %v1024 = vunpack.c.l.b16 %v296
    %v1025 = vunpack.c.h.b16 %v296
    %v1026 = vunpack.c.l.b16 %v297
    %v1027 = vunpack.c.h.b16 %v297
    %v1028 = vunpack.c.l.b16 %v298
    %v1029 = vunpack.c.h.b16 %v298
    %v1030 = vunpack.c.l.b16 %v299
    %v1031 = vunpack.c.h.b16 %v299
    %v1032 = vunpack.c.l.b16 %v300
    %v1033 = vunpack.c.h.b16 %v300
    %v1034 = vunpack.c.l.b16 %v301
    %v1035 = vunpack.c.h.b16 %v301
    %v1036 = vunpack.c.l.b16 %v302
    %v1037 = vunpack.c.h.b16 %v302
    %v1038 = vunpack.c.l.b16 %v303
    %v1039 = vunpack.c.h.b16 %v303
    %v1040 = vunpack.c.l.b16 %v304
    %v1041 = vunpack.c.h.b16 %v304
    %v1042 = vunpack.c.l.b16 %v305
    %v1043 = vunpack.c.h.b16 %v305
    %v1044 = vunpack.c.l.b16 %v306
    %v1045 = vunpack.c.h.b16 %v306
    %v1046 = vunpack.c.l.b16 %v307
    %v1047 = vunpack.c.h.b16 %v307
    %v1048 = vunpack.c.l.b16 %v308
    %v1049 = vunpack.c.h.b16 %v308
    %v1050 = vunpack.c.l.b16 %v309
    %v1051 = vunpack.c.h.b16 %v309
    %v1052 = vunpack.c.l.b16 %v310
    %v1053 = vunpack.c.h.b16 %v310
    %v1054 = vunpack.c.l.b16 %v311
    %v1055 = vunpack.c.h.b16 %v311
    %v1056 = vunpack.c.l.b16 %v312
    %v1057 = vunpack.c.h.b16 %v312
    %v1058 = vunpack.c.l.b16 %v313
    %v1059 = vunpack.c.h.b16 %v313
    %v1060 = vunpack.c.l.b16 %v314
    %v1061 = vunpack.c.h.b16 %v314
    %v1062 = vunpack.c.l.b16 %v315
    %v1063 = vunpack.c.h.b16 %v315
    %v1064 = vunpack.c.l.b16 %v316
    %v1065 = vunpack.c.h.b16 %v316
    %v1066 = vunpack.c.l.b16 %v317
    %v1067 = vunpack.c.h.b16 %v317
    %v1068 = vunpack.c.l.b16 %v318
    %v1069 = vunpack.c.h.b16 %v318
    %v1070 = vunpack.c.l.b16 %v319
    %v1071 = vunpack.c.h.b16 %v319
    %v1072 = vunpack.c.l.b16 %v320
    %v1073 = vunpack.c.h.b16 %v320
    %v1074 = vunpack.c.l.b16 %v321
    %v1075 = vunpack.c.h.b16 %v321
    %v1076 = vunpack.c.l.b16 %v322
    %v1077 = vunpack.c.h.b16 %v322
    %v1078 = vunpack.c.l.b16 %v323
    %v1079 = vunpack.c.h.b16 %v323
    %v1080 = vunpack.c.l.b16 %v324
    %v1081 = vunpack.c.h.b16 %v324
    %v1082 = vunpack.c.l.b16 %v325
    %v1083 = vunpack.c.h.b16 %v325
    %v1084 = vunpack.c.l.b16 %v326
    %v1085 = vunpack.c.h.b16 %v326
    %v1086 = vunpack.c.l.b16 %v327
    %v1087 = vunpack.c.h.b16 %v327
    %v1088 = vunpack.c.l.b16 %v328
    %v1089 = vunpack.c.h.b16 %v328
    %v1090 = vunpack.c.l.b16 %v329
    %v1091 = vunpack.c.h.b16 %v329
    %v1092 = vunpack.c.l.b16 %v330
    %v1093 = vunpack.c.h.b16 %v330
    %v1094 = vunpack.c.l.b16 %v331
    %v1095 = vunpack.c.h.b16 %v331
    %v1096 = vunpack.c.l.b16 %v332
    %v1097 = vunpack.c.h.b16 %v332
    %v1098 = vunpack.c.l.b16 %v333
    %v1099 = vunpack.c.h.b16 %v333
    %v1100 = vunpack.c.l.b16 %v334
    %v1101 = vunpack.c.h.b16 %v334
    %v1102 = vunpack.c.l.b16 %v335
    %v1103 = vunpack.c.h.b16 %v335
    %v1104 = vunpack.c.l.b16 %v336
    %v1105 = vunpack.c.h.b16 %v336
    %v1106 = vunpack.c.l.b16 %v337
    %v1107 = vunpack.c.h.b16 %v337
    %v1108 = vunpack.c.l.b16 %v338
    %v1109 = vunpack.c.h.b16 %v338
    %v1110 = vunpack.c.l.b16 %v339
    %v1111 = vunpack.c.h.b16 %v339
    %v1112 = vunpack.c.l.b16 %v340
    %v1113 = vunpack.c.h.b16 %v340
    %v1114 = vunpack.c.l.b16 %v341
    %v1115 = vunpack.c.h.b16 %v341
    %v1116 = vunpack.c.l.b16 %v342
    %v1117 = vunpack.c.h.b16 %v342
    %v1118 = vunpack.c.l.b16 %v343
    %v1119 = vunpack.c.h.b16 %v343
    %v1120 = vunpack.c.l.b16 %v344
    %v1121 = vunpack.c.h.b16 %v344
    %v1122 = vunpack.c.l.b16 %v345
    %v1123 = vunpack.c.h.b16 %v345
    %v1124 = vunpack.c.l.b16 %v346
    %v1125 = vunpack.c.h.b16 %v346
    %v1126 = vunpack.c.l.b16 %v347
    %v1127 = vunpack.c.h.b16 %v347
    %v1128 = vunpack.c.l.b16 %v348
    %v1129 = vunpack.c.h.b16 %v348
    %v1130 = vunpack.c.l.b16 %v349
    %v1131 = vunpack.c.h.b16 %v349
    %v1132 = vunpack.c.l.b16 %v350
    %v1133 = vunpack.c.h.b16 %v350
    %v1134 = vunpack.c.l.b16 %v351
    %v1135 = vunpack.c.h.b16 %v351
    %v1136 = vunpack.c.l.b16 %v352
    %v1137 = vunpack.c.h.b16 %v352
    %v1138 = vunpack.c.l.b16 %v353
    %v1139 = vunpack.c.h.b16 %v353
    %v1140 = vunpack.c.l.b16 %v354
    %v1141 = vunpack.c.h.b16 %v354
    %v1142 = vunpack.c.l.b16 %v355
    %v1143 = vunpack.c.h.b16 %v355
    %v1144 = vunpack.c.l.b16 %v356
    %v1145 = vunpack.c.h.b16 %v356
    %v1146 = vunpack.c.l.b16 %v357
    %v1147 = vunpack.c.h.b16 %v357
    %v1148 = vunpack.c.l.b16 %v358
    %v1149 = vunpack.c.h.b16 %v358
    %v1150 = vunpack.c.l.b16 %v359
    %v1151 = vunpack.c.h.b16 %v359
    %v1152 = vunpack.c.l.b16 %v360
    %v1153 = vunpack.c.h.b16 %v360
    %v1154 = vunpack.c.l.b16 %v361
    %v1155 = vunpack.c.h.b16 %v361
    %v1156 = vunpack.c.l.b16 %v362
    %v1157 = vunpack.c.h.b16 %v362
    %v1158 = vunpack.c.l.b16 %v363
    %v1159 = vunpack.c.h.b16 %v363
    %v1160 = vpack.c.b16 %v652, %v648
    %v1161 = vpack.c.b16 %v653, %v649
    %v1162 = vpack.c.b16 %v654, %v650
    %v1163 = vpack.c.b16 %v655, %v651
    %v1164 = vpack.c.b16 %v660, %v656
    %v1165 = vpack.c.b16 %v661, %v657
    %v1166 = vpack.c.b16 %v662, %v658
    %v1167 = vpack.c.b16 %v663, %v659
    %v1168 = vpack.c.b16 %v668, %v664
    %v1169 = vpack.c.b16 %v669, %v665
    %v1170 = vpack.c.b16 %v670, %v666
    %v1171 = vpack.c.b16 %v671, %v667
    %v1172 = vpack.c.b16 %v676, %v672
    %v1173 = vpack.c.b16 %v677, %v673
    %v1174 = vpack.c.b16 %v678, %v674
    %v1175 = vpack.c.b16 %v679, %v675
    %v1176 = vpack.c.b16 %v684, %v680
    %v1177 = vpack.c.b16 %v685, %v681
    %v1178 = vpack.c.b16 %v686, %v682
    %v1179 = vpack.c.b16 %v687, %v683
    %v1180 = vpack.c.b16 %v692, %v688
    %v1181 = vpack.c.b16 %v693, %v689
    %v1182 = vpack.c.b16 %v694, %v690
    %v1183 = vpack.c.b16 %v695, %v691
    %v1184 = vpack.c.b16 %v700, %v696
    %v1185 = vpack.c.b16 %v701, %v697
    %v1186 = vpack.c.b16 %v702, %v698
    %v1187 = vpack.c.b16 %v703, %v699
    %v1188 = vpack.c.b16 %v708, %v704
    %v1189 = vpack.c.b16 %v709, %v705
    %v1190 = vpack.c.b16 %v710, %v706
    %v1191 = vpack.c.b16 %v711, %v707
    %v1192 = vpack.c.b16 %v716, %v712
    %v1193 = vpack.c.b16 %v717, %v713
    %v1194 = vpack.c.b16 %v718, %v714
    %v1195 = vpack.c.b16 %v719, %v715
    %v1196 = vpack.c.b16 %v724, %v720
    %v1197 = vpack.c.b16 %v725, %v721
    %v1198 = vpack.c.b16 %v726, %v722
    %v1199 = vpack.c.b16 %v727, %v723
    %v1200 = vpack.c.b16 %v732, %v728
    %v1201 = vpack.c.b16 %v733, %v729
    %v1202 = vpack.c.b16 %v734, %v730
    %v1203 = vpack.c.b16 %v735, %v731
    %v1204 = vpack.c.b16 %v740, %v736
    %v1205 = vpack.c.b16 %v741, %v737
    %v1206 = vpack.c.b16 %v742, %v738
    %v1207 = vpack.c.b16 %v743, %v739
    %v1208 = vpack.c.b16 %v748, %v744
    %v1209 = vpack.c.b16 %v749, %v745
    %v1210 = vpack.c.b16 %v750, %v746
    %v1211 = vpack.c.b16 %v751, %v747
    %v1212 = vpack.c.b16 %v756, %v752
    %v1213 = vpack.c.b16 %v757, %v753
    %v1214 = vpack.c.b16 %v758, %v754
    %v1215 = vpack.c.b16 %v759, %v755
    %v1216 = vpack.c.b16 %v764, %v760
    %v1217 = vpack.c.b16 %v765, %v761
    %v1218 = vpack.c.b16 %v766, %v762
    %v1219 = vpack.c.b16 %v767, %v763
    %v1220 = vpack.c.b16 %v772, %v768
    %v1221 = vpack.c.b16 %v773, %v769
    %v1222 = vpack.c.b16 %v774, %v770
    %v1223 = vpack.c.b16 %v775, %v771
    %v1224 = vpack.c.b16 %v780, %v776
    %v1225 = vpack.c.b16 %v781, %v777
    %v1226 = vpack.c.b16 %v782, %v778
    %v1227 = vpack.c.b16 %v783, %v779
    %v1228 = vpack.c.b16 %v788, %v784
    %v1229 = vpack.c.b16 %v789, %v785
    %v1230 = vpack.c.b16 %v790, %v786
    %v1231 = vpack.c.b16 %v791, %v787
    %v1232 = vpack.c.b16 %v796, %v792
    %v1233 = vpack.c.b16 %v797, %v793
    %v1234 = vpack.c.b16 %v798, %v794
    %v1235 = vpack.c.b16 %v799, %v795
    %v1236 = vpack.c.b16 %v804, %v800
    %v1237 = vpack.c.b16 %v805, %v801
    %v1238 = vpack.c.b16 %v806, %v802
    %v1239 = vpack.c.b16 %v807, %v803
    %v1240 = vpack.c.b16 %v812, %v808
    %v1241 = vpack.c.b16 %v813, %v809
    %v1242 = vpack.c.b16 %v814, %v810
    %v1243 = vpack.c.b16 %v815, %v811
    %v1244 = vpack.c.b16 %v820, %v816
    %v1245 = vpack.c.b16 %v821, %v817
    %v1246 = vpack.c.b16 %v822, %v818
    %v1247 = vpack.c.b16 %v823, %v819
    %v1248 = vpack.c.b16 %v828, %v824
    %v1249 = vpack.c.b16 %v829, %v825
    %v1250 = vpack.c.b16 %v830, %v826
    %v1251 = vpack.c.b16 %v831, %v827
    %v1252 = vpack.c.b16 %v836, %v832
    %v1253 = vpack.c.b16 %v837, %v833
    %v1254 = vpack.c.b16 %v838, %v834
    %v1255 = vpack.c.b16 %v839, %v835
    %v1256 = vpack.c.b16 %v844, %v840
    %v1257 = vpack.c.b16 %v845, %v841
    %v1258 = vpack.c.b16 %v846, %v842
    %v1259 = vpack.c.b16 %v847, %v843
    %v1260 = vpack.c.b16 %v852, %v848
    %v1261 = vpack.c.b16 %v853, %v849
    %v1262 = vpack.c.b16 %v854, %v850
    %v1263 = vpack.c.b16 %v855, %v851
    %v1264 = vpack.c.b16 %v860, %v856
    %v1265 = vpack.c.b16 %v861, %v857
    %v1266 = vpack.c.b16 %v862, %v858
    %v1267 = vpack.c.b16 %v863, %v859
    %v1268 = vpack.c.b16 %v868, %v864
    %v1269 = vpack.c.b16 %v869, %v865
    %v1270 = vpack.c.b16 %v870, %v866
    %v1271 = vpack.c.b16 %v871, %v867
    %v1272 = vpack.c.b16 %v876, %v872
    %v1273 = vpack.c.b16 %v877, %v873
    %v1274 = vpack.c.b16 %v878, %v874
    %v1275 = vpack.c.b16 %v879, %v875
    %v1276 = vpack.c.b16 %v884, %v880
    %v1277 = vpack.c.b16 %v885, %v881
    %v1278 = vpack.c.b16 %v886, %v882
    %v1279 = vpack.c.b16 %v887, %v883
    %v1280 = vpack.c.b16 %v892, %v888
    %v1281 = vpack.c.b16 %v893, %v889
    %v1282 = vpack.c.b16 %v894, %v890
    %v1283 = vpack.c.b16 %v895, %v891
    %v1284 = vpack.c.b16 %v900, %v896
    %v1285 = vpack.c.b16 %v901, %v897
    %v1286 = vpack.c.b16 %v902, %v898
    %v1287 = vpack.c.b16 %v903, %v899
    %v1288 = vpack.c.b16 %v908, %v904
    %v1289 = vpack.c.b16 %v909, %v905
    %v1290 = vpack.c.b16 %v910, %v906
    %v1291 = vpack.c.b16 %v911, %v907
    %v1292 = vpack.c.b16 %v916, %v912
    %v1293 = vpack.c.b16 %v917, %v913
    %v1294 = vpack.c.b16 %v918, %v914
    %v1295 = vpack.c.b16 %v919, %v915
    %v1296 = vpack.c.b16 %v924, %v920
    %v1297 = vpack.c.b16 %v925, %v921
    %v1298 = vpack.c.b16 %v926, %v922
    %v1299 = vpack.c.b16 %v927, %v923
    %v1300 = vpack.c.b16 %v932, %v928
    %v1301 = vpack.c.b16 %v933, %v929
    %v1302 = vpack.c.b16 %v934, %v930
    %v1303 = vpack.c.b16 %v935, %v931
    %v1304 = vpack.c.b16 %v940, %v936
    %v1305 = vpack.c.b16 %v941, %v937
    %v1306 = vpack.c.b16 %v942, %v938
    %v1307 = vpack.c.b16 %v943, %v939
    %v1308 = vpack.c.b16 %v948, %v944
    %v1309 = vpack.c.b16 %v949, %v945
    %v1310 = vpack.c.b16 %v950, %v946
    %v1311 = vpack.c.b16 %v951, %v947
    %v1312 = vpack.c.b16 %v956, %v952
    %v1313 = vpack.c.b16 %v957, %v953
    %v1314 = vpack.c.b16 %v958, %v954
    %v1315 = vpack.c.b16 %v959, %v955
    %v1316 = vpack.c.b16 %v964, %v960
    %v1317 = vpack.c.b16 %v965, %v961
    %v1318 = vpack.c.b16 %v966, %v962
    %v1319 = vpack.c.b16 %v967, %v963
    %v1320 = vpack.c.b16 %v972, %v968
    %v1321 = vpack.c.b16 %v973, %v969
    %v1322 = vpack.c.b16 %v974, %v970
    %v1323 = vpack.c.b16 %v975, %v971
    %v1324 = vpack.c.b16 %v980, %v976
    %v1325 = vpack.c.b16 %v981, %v977
    %v1326 = vpack.c.b16 %v982, %v978
    %v1327 = vpack.c.b16 %v983, %v979
    %v1328 = vpack.c.b16 %v988, %v984
    %v1329 = vpack.c.b16 %v989, %v985
    %v1330 = vpack.c.b16 %v990, %v986
    %v1331 = vpack.c.b16 %v991, %v987
    %v1332 = vpack.c.b16 %v996, %v992
    %v1333 = vpack.c.b16 %v997, %v993
    %v1334 = vpack.c.b16 %v998, %v994
    %v1335 = vpack.c.b16 %v999, %v995
    %v1336 = vpack.c.b16 %v1004, %v1000
    %v1337 = vpack.c.b16 %v1005, %v1001
    %v1338 = vpack.c.b16 %v1006, %v1002
    %v1339 = vpack.c.b16 %v1007, %v1003
    %v1340 = vpack.c.b16 %v1012, %v1008
    %v1341 = vpack.c.b16 %v1013, %v1009
    %v1342 = vpack.c.b16 %v1014, %v1010
    %v1343 = vpack.c.b16 %v1015, %v1011
    %v1344 = vpack.c.b16 %v1020, %v1016
    %v1345 = vpack.c.b16 %v1021, %v1017
    %v1346 = vpack.c.b16 %v1022, %v1018
    %v1347 = vpack.c.b16 %v1023, %v1019
    %v1348 = vpack.c.b16 %v1028, %v1024
    %v1349 = vpack.c.b16 %v1029, %v1025
    %v1350 = vpack.c.b16 %v1030, %v1026
    %v1351 = vpack.c.b16 %v1031, %v1027
    %v1352 = vpack.c.b16 %v1036, %v1032
    %v1353 = vpack.c.b16 %v1037, %v1033
    %v1354 = vpack.c.b16 %v1038, %v1034
    %v1355 = vpack.c.b16 %v1039, %v1035
    %v1356 = vpack.c.b16 %v1044, %v1040
    %v1357 = vpack.c.b16 %v1045, %v1041
    %v1358 = vpack.c.b16 %v1046, %v1042
    %v1359 = vpack.c.b16 %v1047, %v1043
    %v1360 = vpack.c.b16 %v1052, %v1048
    %v1361 = vpack.c.b16 %v1053, %v1049
    %v1362 = vpack.c.b16 %v1054, %v1050
    %v1363 = vpack.c.b16 %v1055, %v1051
    %v1364 = vpack.c.b16 %v1060, %v1056
    %v1365 = vpack.c.b16 %v1061, %v1057
    %v1366 = vpack.c.b16 %v1062, %v1058
    %v1367 = vpack.c.b16 %v1063, %v1059
    %v1368 = vpack.c.b16 %v1068, %v1064
    %v1369 = vpack.c.b16 %v1069, %v1065
    %v1370 = vpack.c.b16 %v1070, %v1066
    %v1371 = vpack.c.b16 %v1071, %v1067
    %v1372 = vpack.c.b16 %v1076, %v1072
    %v1373 = vpack.c.b16 %v1077, %v1073
    %v1374 = vpack.c.b16 %v1078, %v1074
    %v1375 = vpack.c.b16 %v1079, %v1075
    %v1376 = vpack.c.b16 %v1084, %v1080
    %v1377 = vpack.c.b16 %v1085, %v1081
    %v1378 = vpack.c.b16 %v1086, %v1082
    %v1379 = vpack.c.b16 %v1087, %v1083
    %v1380 = vpack.c.b16 %v1092, %v1088
    %v1381 = vpack.c.b16 %v1093, %v1089
    %v1382 = vpack.c.b16 %v1094, %v1090
    %v1383 = vpack.c.b16 %v1095, %v1091
    %v1384 = vpack.c.b16 %v1100, %v1096
    %v1385 = vpack.c.b16 %v1101, %v1097
    %v1386 = vpack.c.b16 %v1102, %v1098
    %v1387 = vpack.c.b16 %v1103, %v1099
    %v1388 = vpack.c.b16 %v1108, %v1104
    %v1389 = vpack.c.b16 %v1109, %v1105
    %v1390 = vpack.c.b16 %v1110, %v1106
    %v1391 = vpack.c.b16 %v1111, %v1107
    %v1392 = vpack.c.b16 %v1116, %v1112
    %v1393 = vpack.c.b16 %v1117, %v1113
    %v1394 = vpack.c.b16 %v1118, %v1114
    %v1395 = vpack.c.b16 %v1119, %v1115
    %v1396 = vpack.c.b16 %v1124, %v1120
    %v1397 = vpack.c.b16 %v1125, %v1121
    %v1398 = vpack.c.b16 %v1126, %v1122
    %v1399 = vpack.c.b16 %v1127, %v1123
    %v1400 = vpack.c.b16 %v1132, %v1128
    %v1401 = vpack.c.b16 %v1133, %v1129
    %v1402 = vpack.c.b16 %v1134, %v1130
    %v1403 = vpack.c.b16 %v1135, %v1131
    %v1404 = vpack.c.b16 %v1140, %v1136
    %v1405 = vpack.c.b16 %v1141, %v1137
    %v1406 = vpack.c.b16 %v1142, %v1138
    %v1407 = vpack.c.b16 %v1143, %v1139
    %v1408 = vpack.c.b16 %v1148, %v1144
    %v1409 = vpack.c.b16 %v1149, %v1145
    %v1410 = vpack.c.b16 %v1150, %v1146
    %v1411 = vpack.c.b16 %v1151, %v1147
    %v1412 = vpack.c.b16 %v1156, %v1152
    %v1413 = vpack.c.b16 %v1157, %v1153
    %v1414 = vpack.c.b16 %v1158, %v1154
    %v1415 = vpack.c.b16 %v1159, %v1155
    %1672 = vmatpush.bf16.msra.mxu0 %v1188
    %1673 = vmatpush.bf16.msra.mxu0 %v1184
    %1674 = vmatpush.bf16.msra.mxu0 %v1180
    %1675 = vmatpush.bf16.msra.mxu0 %v1176
    %1676 = vmatpush.bf16.msra.mxu0 %v1172
    %1677 = vmatpush.bf16.msra.mxu0 %v1168
    %1678 = vmatpush.bf16.msra.mxu0 %v1164
    %1679 = vmatpush.bf16.msra.mxu0 %v1160
    %1680 = vmatmul.bf16.gmra.mxu0 %v376
    %v1681 = vpop.f32.mrf.mxu0
    %v1682 = vadd.f32 %v366, %v1681
    %v1683 = vpop.f32.mrf.mxu0
    %1684 = vdwg.mxu0
    %1685 = vmatpush.bf16.msra.mxu0 %v1220
    %1686 = vmatpush.bf16.msra.mxu0 %v1216
    %1687 = vmatpush.bf16.msra.mxu0 %v1212
    %1688 = vmatpush.bf16.msra.mxu0 %v1208
    %1689 = vmatpush.bf16.msra.mxu0 %v1204
    %1690 = vmatpush.bf16.msra.mxu0 %v1200
    %1691 = vmatpush.bf16.msra.mxu0 %v1196
    %1692 = vmatpush.bf16.msra.mxu0 %v1192
    %1693 = vmatmul.bf16.gmra.mxu0 %v377
    %v1694 = vpop.f32.mrf.mxu0
    %v1695 = vadd.f32 %v1682, %v1694
    %v1696 = vpop.f32.mrf.mxu0
    %1697 = vdwg.mxu0
    %1698 = vmatpush.bf16.msra.mxu0 %v1252
    %1699 = vmatpush.bf16.msra.mxu0 %v1248
    %1700 = vmatpush.bf16.msra.mxu0 %v1244
    %1701 = vmatpush.bf16.msra.mxu0 %v1240
    %1702 = vmatpush.bf16.msra.mxu0 %v1236
    %1703 = vmatpush.bf16.msra.mxu0 %v1232
    %1704 = vmatpush.bf16.msra.mxu0 %v1228
    %1705 = vmatpush.bf16.msra.mxu0 %v1224
    %1706 = vmatmul.bf16.gmra.mxu0 %v378
    %v1707 = vpop.f32.mrf.mxu0
    %v1708 = vadd.f32 %v1695, %v1707
    %v1709 = vpop.f32.mrf.mxu0
    %1710 = vdwg.mxu0
    %1711 = vmatpush.bf16.msra.mxu0 %v1284
    %1712 = vmatpush.bf16.msra.mxu0 %v1280
    %1713 = vmatpush.bf16.msra.mxu0 %v1276
    %1714 = vmatpush.bf16.msra.mxu0 %v1272
    %1715 = vmatpush.bf16.msra.mxu0 %v1268
    %1716 = vmatpush.bf16.msra.mxu0 %v1264
    %1717 = vmatpush.bf16.msra.mxu0 %v1260
    %1718 = vmatpush.bf16.msra.mxu0 %v1256
    %1719 = vmatmul.bf16.gmra.mxu0 %v379
    %v1720 = vpop.f32.mrf.mxu0
    %v1721 = vadd.f32 %v1708, %v1720
    %v1722 = vpop.f32.mrf.mxu0
    %1723 = vdwg.mxu0
    %1724 = vmatpush.bf16.msra.mxu0 %v1316
    %1725 = vmatpush.bf16.msra.mxu0 %v1312
    %1726 = vmatpush.bf16.msra.mxu0 %v1308
    %1727 = vmatpush.bf16.msra.mxu0 %v1304
    %1728 = vmatpush.bf16.msra.mxu0 %v1300
    %1729 = vmatpush.bf16.msra.mxu0 %v1296
    %1730 = vmatpush.bf16.msra.mxu0 %v1292
    %1731 = vmatpush.bf16.msra.mxu0 %v1288
    %1732 = vmatmul.bf16.gmra.mxu0 %v380
    %v1733 = vpop.f32.mrf.mxu0
    %v1734 = vadd.f32 %v1721, %v1733
    %v1735 = vpop.f32.mrf.mxu0
    %1736 = vdwg.mxu0
    %1737 = vmatpush.bf16.msra.mxu0 %v1348
    %1738 = vmatpush.bf16.msra.mxu0 %v1344
    %1739 = vmatpush.bf16.msra.mxu0 %v1340
    %1740 = vmatpush.bf16.msra.mxu0 %v1336
    %1741 = vmatpush.bf16.msra.mxu0 %v1332
    %1742 = vmatpush.bf16.msra.mxu0 %v1328
    %1743 = vmatpush.bf16.msra.mxu0 %v1324
    %1744 = vmatpush.bf16.msra.mxu0 %v1320
    %1745 = vmatmul.bf16.gmra.mxu0 %v381
    %v1746 = vpop.f32.mrf.mxu0
    %v1747 = vadd.f32 %v1734, %v1746
    %v1748 = vpop.f32.mrf.mxu0
    %1749 = vdwg.mxu0
    %1750 = vmatpush.bf16.msra.mxu0 %v1380
    %1751 = vmatpush.bf16.msra.mxu0 %v1376
    %1752 = vmatpush.bf16.msra.mxu0 %v1372
    %1753 = vmatpush.bf16.msra.mxu0 %v1368
    %1754 = vmatpush.bf16.msra.mxu0 %v1364
    %1755 = vmatpush.bf16.msra.mxu0 %v1360
    %1756 = vmatpush.bf16.msra.mxu0 %v1356
    %1757 = vmatpush.bf16.msra.mxu0 %v1352
    %1758 = vmatmul.bf16.gmra.mxu0 %v382
    %v1759 = vpop.f32.mrf.mxu0
    %v1760 = vadd.f32 %v1747, %v1759
    %v1761 = vpop.f32.mrf.mxu0
    %1762 = vdwg.mxu0
    %1763 = vmatpush.bf16.msra.mxu0 %v1412
    %1764 = vmatpush.bf16.msra.mxu0 %v1408
    %1765 = vmatpush.bf16.msra.mxu0 %v1404
    %1766 = vmatpush.bf16.msra.mxu0 %v1400
    %1767 = vmatpush.bf16.msra.mxu0 %v1396
    %1768 = vmatpush.bf16.msra.mxu0 %v1392
    %1769 = vmatpush.bf16.msra.mxu0 %v1388
    %1770 = vmatpush.bf16.msra.mxu0 %v1384
    %1771 = vmatmul.bf16.gmra.mxu0 %v383
    %v1772 = vpop.f32.mrf.mxu0
    %v1773 = vadd.f32 %v1760, %v1772
    %v1774 = vpop.f32.mrf.mxu0
    %1775 = vdwg.mxu0
    %1776 = vmatpush.bf16.msra.mxu0 %v1189
    %1777 = vmatpush.bf16.msra.mxu0 %v1185
    %1778 = vmatpush.bf16.msra.mxu0 %v1181
    %1779 = vmatpush.bf16.msra.mxu0 %v1177
    %1780 = vmatpush.bf16.msra.mxu0 %v1173
    %1781 = vmatpush.bf16.msra.mxu0 %v1169
    %1782 = vmatpush.bf16.msra.mxu0 %v1165
    %1783 = vmatpush.bf16.msra.mxu0 %v1161
    %1784 = vmatmul.bf16.gmra.mxu0 %v376
    %v1785 = vpop.f32.mrf.mxu0
    %v1786 = vadd.f32 %v367, %v1785
    %v1787 = vpop.f32.mrf.mxu0
    %1788 = vdwg.mxu0
    %1789 = vmatpush.bf16.msra.mxu0 %v1221
    %1790 = vmatpush.bf16.msra.mxu0 %v1217
    %1791 = vmatpush.bf16.msra.mxu0 %v1213
    %1792 = vmatpush.bf16.msra.mxu0 %v1209
    %1793 = vmatpush.bf16.msra.mxu0 %v1205
    %1794 = vmatpush.bf16.msra.mxu0 %v1201
    %1795 = vmatpush.bf16.msra.mxu0 %v1197
    %1796 = vmatpush.bf16.msra.mxu0 %v1193
    %1797 = vmatmul.bf16.gmra.mxu0 %v377
    %v1798 = vpop.f32.mrf.mxu0
    %v1799 = vadd.f32 %v1786, %v1798
    %v1800 = vpop.f32.mrf.mxu0
    %1801 = vdwg.mxu0
    %1802 = vmatpush.bf16.msra.mxu0 %v1253
    %1803 = vmatpush.bf16.msra.mxu0 %v1249
    %1804 = vmatpush.bf16.msra.mxu0 %v1245
    %1805 = vmatpush.bf16.msra.mxu0 %v1241
    %1806 = vmatpush.bf16.msra.mxu0 %v1237
    %1807 = vmatpush.bf16.msra.mxu0 %v1233
    %1808 = vmatpush.bf16.msra.mxu0 %v1229
    %1809 = vmatpush.bf16.msra.mxu0 %v1225
    %1810 = vmatmul.bf16.gmra.mxu0 %v378
    %v1811 = vpop.f32.mrf.mxu0
    %v1812 = vadd.f32 %v1799, %v1811
    %v1813 = vpop.f32.mrf.mxu0
    %1814 = vdwg.mxu0
    %1815 = vmatpush.bf16.msra.mxu0 %v1285
    %1816 = vmatpush.bf16.msra.mxu0 %v1281
    %1817 = vmatpush.bf16.msra.mxu0 %v1277
    %1818 = vmatpush.bf16.msra.mxu0 %v1273
    %1819 = vmatpush.bf16.msra.mxu0 %v1269
    %1820 = vmatpush.bf16.msra.mxu0 %v1265
    %1821 = vmatpush.bf16.msra.mxu0 %v1261
    %1822 = vmatpush.bf16.msra.mxu0 %v1257
    %1823 = vmatmul.bf16.gmra.mxu0 %v379
    %v1824 = vpop.f32.mrf.mxu0
    %v1825 = vadd.f32 %v1812, %v1824
    %v1826 = vpop.f32.mrf.mxu0
    %1827 = vdwg.mxu0
    %1828 = vmatpush.bf16.msra.mxu0 %v1317
    %1829 = vmatpush.bf16.msra.mxu0 %v1313
    %1830 = vmatpush.bf16.msra.mxu0 %v1309
    %1831 = vmatpush.bf16.msra.mxu0 %v1305
    %1832 = vmatpush.bf16.msra.mxu0 %v1301
    %1833 = vmatpush.bf16.msra.mxu0 %v1297
    %1834 = vmatpush.bf16.msra.mxu0 %v1293
    %1835 = vmatpush.bf16.msra.mxu0 %v1289
    %1836 = vmatmul.bf16.gmra.mxu0 %v380
    %v1837 = vpop.f32.mrf.mxu0
    %v1838 = vadd.f32 %v1825, %v1837
    %v1839 = vpop.f32.mrf.mxu0
    %1840 = vdwg.mxu0
    %1841 = vmatpush.bf16.msra.mxu0 %v1349
    %1842 = vmatpush.bf16.msra.mxu0 %v1345
    %1843 = vmatpush.bf16.msra.mxu0 %v1341
    %1844 = vmatpush.bf16.msra.mxu0 %v1337
    %1845 = vmatpush.bf16.msra.mxu0 %v1333
    %1846 = vmatpush.bf16.msra.mxu0 %v1329
    %1847 = vmatpush.bf16.msra.mxu0 %v1325
    %1848 = vmatpush.bf16.msra.mxu0 %v1321
    %1849 = vmatmul.bf16.gmra.mxu0 %v381
    %v1850 = vpop.f32.mrf.mxu0
    %v1851 = vadd.f32 %v1838, %v1850
    %v1852 = vpop.f32.mrf.mxu0
    %1853 = vdwg.mxu0
    %1854 = vmatpush.bf16.msra.mxu0 %v1381
    %1855 = vmatpush.bf16.msra.mxu0 %v1377
    %1856 = vmatpush.bf16.msra.mxu0 %v1373
    %1857 = vmatpush.bf16.msra.mxu0 %v1369
    %1858 = vmatpush.bf16.msra.mxu0 %v1365
    %1859 = vmatpush.bf16.msra.mxu0 %v1361
    %1860 = vmatpush.bf16.msra.mxu0 %v1357
    %1861 = vmatpush.bf16.msra.mxu0 %v1353
    %1862 = vmatmul.bf16.gmra.mxu0 %v382
    %v1863 = vpop.f32.mrf.mxu0
    %v1864 = vadd.f32 %v1851, %v1863
    %v1865 = vpop.f32.mrf.mxu0
    %1866 = vdwg.mxu0
    %1867 = vmatpush.bf16.msra.mxu0 %v1413
    %1868 = vmatpush.bf16.msra.mxu0 %v1409
    %1869 = vmatpush.bf16.msra.mxu0 %v1405
    %1870 = vmatpush.bf16.msra.mxu0 %v1401
    %1871 = vmatpush.bf16.msra.mxu0 %v1397
    %1872 = vmatpush.bf16.msra.mxu0 %v1393
    %1873 = vmatpush.bf16.msra.mxu0 %v1389
    %1874 = vmatpush.bf16.msra.mxu0 %v1385
    %1875 = vmatmul.bf16.gmra.mxu0 %v383
    %v1876 = vpop.f32.mrf.mxu0
    %v1877 = vadd.f32 %v1864, %v1876
    %v1878 = vpop.f32.mrf.mxu0
    %1879 = vdwg.mxu0
    %1880 = vmatpush.bf16.msra.mxu0 %v1190
    %1881 = vmatpush.bf16.msra.mxu0 %v1186
    %1882 = vmatpush.bf16.msra.mxu0 %v1182
    %1883 = vmatpush.bf16.msra.mxu0 %v1178
    %1884 = vmatpush.bf16.msra.mxu0 %v1174
    %1885 = vmatpush.bf16.msra.mxu0 %v1170
    %1886 = vmatpush.bf16.msra.mxu0 %v1166
    %1887 = vmatpush.bf16.msra.mxu0 %v1162
    %1888 = vmatmul.bf16.gmra.mxu0 %v376
    %v1889 = vpop.f32.mrf.mxu0
    %v1890 = vadd.f32 %v368, %v1889
    %v1891 = vpop.f32.mrf.mxu0
    %1892 = vdwg.mxu0
    %1893 = vmatpush.bf16.msra.mxu0 %v1222
    %1894 = vmatpush.bf16.msra.mxu0 %v1218
    %1895 = vmatpush.bf16.msra.mxu0 %v1214
    %1896 = vmatpush.bf16.msra.mxu0 %v1210
    %1897 = vmatpush.bf16.msra.mxu0 %v1206
    %1898 = vmatpush.bf16.msra.mxu0 %v1202
    %1899 = vmatpush.bf16.msra.mxu0 %v1198
    %1900 = vmatpush.bf16.msra.mxu0 %v1194
    %1901 = vmatmul.bf16.gmra.mxu0 %v377
    %v1902 = vpop.f32.mrf.mxu0
    %v1903 = vadd.f32 %v1890, %v1902
    %v1904 = vpop.f32.mrf.mxu0
    %1905 = vdwg.mxu0
    %1906 = vmatpush.bf16.msra.mxu0 %v1254
    %1907 = vmatpush.bf16.msra.mxu0 %v1250
    %1908 = vmatpush.bf16.msra.mxu0 %v1246
    %1909 = vmatpush.bf16.msra.mxu0 %v1242
    %1910 = vmatpush.bf16.msra.mxu0 %v1238
    %1911 = vmatpush.bf16.msra.mxu0 %v1234
    %1912 = vmatpush.bf16.msra.mxu0 %v1230
    %1913 = vmatpush.bf16.msra.mxu0 %v1226
    %1914 = vmatmul.bf16.gmra.mxu0 %v378
    %v1915 = vpop.f32.mrf.mxu0
    %v1916 = vadd.f32 %v1903, %v1915
    %v1917 = vpop.f32.mrf.mxu0
    %1918 = vdwg.mxu0
    %1919 = vmatpush.bf16.msra.mxu0 %v1286
    %1920 = vmatpush.bf16.msra.mxu0 %v1282
    %1921 = vmatpush.bf16.msra.mxu0 %v1278
    %1922 = vmatpush.bf16.msra.mxu0 %v1274
    %1923 = vmatpush.bf16.msra.mxu0 %v1270
    %1924 = vmatpush.bf16.msra.mxu0 %v1266
    %1925 = vmatpush.bf16.msra.mxu0 %v1262
    %1926 = vmatpush.bf16.msra.mxu0 %v1258
    %1927 = vmatmul.bf16.gmra.mxu0 %v379
    %v1928 = vpop.f32.mrf.mxu0
    %v1929 = vadd.f32 %v1916, %v1928
    %v1930 = vpop.f32.mrf.mxu0
    %1931 = vdwg.mxu0
    %1932 = vmatpush.bf16.msra.mxu0 %v1318
    %1933 = vmatpush.bf16.msra.mxu0 %v1314
    %1934 = vmatpush.bf16.msra.mxu0 %v1310
    %1935 = vmatpush.bf16.msra.mxu0 %v1306
    %1936 = vmatpush.bf16.msra.mxu0 %v1302
    %1937 = vmatpush.bf16.msra.mxu0 %v1298
    %1938 = vmatpush.bf16.msra.mxu0 %v1294
    %1939 = vmatpush.bf16.msra.mxu0 %v1290
    %1940 = vmatmul.bf16.gmra.mxu0 %v380
    %v1941 = vpop.f32.mrf.mxu0
    %v1942 = vadd.f32 %v1929, %v1941
    %v1943 = vpop.f32.mrf.mxu0
    %1944 = vdwg.mxu0
    %1945 = vmatpush.bf16.msra.mxu0 %v1350
    %1946 = vmatpush.bf16.msra.mxu0 %v1346
    %1947 = vmatpush.bf16.msra.mxu0 %v1342
    %1948 = vmatpush.bf16.msra.mxu0 %v1338
    %1949 = vmatpush.bf16.msra.mxu0 %v1334
    %1950 = vmatpush.bf16.msra.mxu0 %v1330
    %1951 = vmatpush.bf16.msra.mxu0 %v1326
    %1952 = vmatpush.bf16.msra.mxu0 %v1322
    %1953 = vmatmul.bf16.gmra.mxu0 %v381
    %v1954 = vpop.f32.mrf.mxu0
    %v1955 = vadd.f32 %v1942, %v1954
    %v1956 = vpop.f32.mrf.mxu0
    %1957 = vdwg.mxu0
    %1958 = vmatpush.bf16.msra.mxu0 %v1382
    %1959 = vmatpush.bf16.msra.mxu0 %v1378
    %1960 = vmatpush.bf16.msra.mxu0 %v1374
    %1961 = vmatpush.bf16.msra.mxu0 %v1370
    %1962 = vmatpush.bf16.msra.mxu0 %v1366
    %1963 = vmatpush.bf16.msra.mxu0 %v1362
    %1964 = vmatpush.bf16.msra.mxu0 %v1358
    %1965 = vmatpush.bf16.msra.mxu0 %v1354
    %1966 = vmatmul.bf16.gmra.mxu0 %v382
    %v1967 = vpop.f32.mrf.mxu0
    %v1968 = vadd.f32 %v1955, %v1967
    %v1969 = vpop.f32.mrf.mxu0
    %1970 = vdwg.mxu0
    %1971 = vmatpush.bf16.msra.mxu0 %v1414
    %1972 = vmatpush.bf16.msra.mxu0 %v1410
    %1973 = vmatpush.bf16.msra.mxu0 %v1406
    %1974 = vmatpush.bf16.msra.mxu0 %v1402
    %1975 = vmatpush.bf16.msra.mxu0 %v1398
    %1976 = vmatpush.bf16.msra.mxu0 %v1394
    %1977 = vmatpush.bf16.msra.mxu0 %v1390
    %1978 = vmatpush.bf16.msra.mxu0 %v1386
    %1979 = vmatmul.bf16.gmra.mxu0 %v383
    %v1980 = vpop.f32.mrf.mxu0
    %v1981 = vadd.f32 %v1968, %v1980
    %v1982 = vpop.f32.mrf.mxu0
    %1983 = vdwg.mxu0
    %1984 = vmatpush.bf16.msra.mxu0 %v1191
    %1985 = vmatpush.bf16.msra.mxu0 %v1187
    %1986 = vmatpush.bf16.msra.mxu0 %v1183
    %1987 = vmatpush.bf16.msra.mxu0 %v1179
    %1988 = vmatpush.bf16.msra.mxu0 %v1175
    %1989 = vmatpush.bf16.msra.mxu0 %v1171
    %1990 = vmatpush.bf16.msra.mxu0 %v1167
    %1991 = vmatpush.bf16.msra.mxu0 %v1163
    %1992 = vmatmul.bf16.gmra.mxu0 %v376
    %v1993 = vpop.f32.mrf.mxu0
    %v1994 = vadd.f32 %v369, %v1993
    %v1995 = vpop.f32.mrf.mxu0
    %1996 = vdwg.mxu0
    %1997 = vmatpush.bf16.msra.mxu0 %v1223
    %1998 = vmatpush.bf16.msra.mxu0 %v1219
    %1999 = vmatpush.bf16.msra.mxu0 %v1215
    %2000 = vmatpush.bf16.msra.mxu0 %v1211
    %2001 = vmatpush.bf16.msra.mxu0 %v1207
    %2002 = vmatpush.bf16.msra.mxu0 %v1203
    %2003 = vmatpush.bf16.msra.mxu0 %v1199
    %2004 = vmatpush.bf16.msra.mxu0 %v1195
    %2005 = vmatmul.bf16.gmra.mxu0 %v377
    %v2006 = vpop.f32.mrf.mxu0
    %v2007 = vadd.f32 %v1994, %v2006
    %v2008 = vpop.f32.mrf.mxu0
    %2009 = vdwg.mxu0
    %2010 = vmatpush.bf16.msra.mxu0 %v1255
    %2011 = vmatpush.bf16.msra.mxu0 %v1251
    %2012 = vmatpush.bf16.msra.mxu0 %v1247
    %2013 = vmatpush.bf16.msra.mxu0 %v1243
    %2014 = vmatpush.bf16.msra.mxu0 %v1239
    %2015 = vmatpush.bf16.msra.mxu0 %v1235
    %2016 = vmatpush.bf16.msra.mxu0 %v1231
    %2017 = vmatpush.bf16.msra.mxu0 %v1227
    %2018 = vmatmul.bf16.gmra.mxu0 %v378
    %v2019 = vpop.f32.mrf.mxu0
    %v2020 = vadd.f32 %v2007, %v2019
    %v2021 = vpop.f32.mrf.mxu0
    %2022 = vdwg.mxu0
    %2023 = vmatpush.bf16.msra.mxu0 %v1287
    %2024 = vmatpush.bf16.msra.mxu0 %v1283
    %2025 = vmatpush.bf16.msra.mxu0 %v1279
    %2026 = vmatpush.bf16.msra.mxu0 %v1275
    %2027 = vmatpush.bf16.msra.mxu0 %v1271
    %2028 = vmatpush.bf16.msra.mxu0 %v1267
    %2029 = vmatpush.bf16.msra.mxu0 %v1263
    %2030 = vmatpush.bf16.msra.mxu0 %v1259
    %2031 = vmatmul.bf16.gmra.mxu0 %v379
    %v2032 = vpop.f32.mrf.mxu0
    %v2033 = vadd.f32 %v2020, %v2032
    %v2034 = vpop.f32.mrf.mxu0
    %2035 = vdwg.mxu0
    %2036 = vmatpush.bf16.msra.mxu0 %v1319
    %2037 = vmatpush.bf16.msra.mxu0 %v1315
    %2038 = vmatpush.bf16.msra.mxu0 %v1311
    %2039 = vmatpush.bf16.msra.mxu0 %v1307
    %2040 = vmatpush.bf16.msra.mxu0 %v1303
    %2041 = vmatpush.bf16.msra.mxu0 %v1299
    %2042 = vmatpush.bf16.msra.mxu0 %v1295
    %2043 = vmatpush.bf16.msra.mxu0 %v1291
    %2044 = vmatmul.bf16.gmra.mxu0 %v380
    %v2045 = vpop.f32.mrf.mxu0
    %v2046 = vadd.f32 %v2033, %v2045
    %v2047 = vpop.f32.mrf.mxu0
    %2048 = vdwg.mxu0
    %2049 = vmatpush.bf16.msra.mxu0 %v1351
    %2050 = vmatpush.bf16.msra.mxu0 %v1347
    %2051 = vmatpush.bf16.msra.mxu0 %v1343
    %2052 = vmatpush.bf16.msra.mxu0 %v1339
    %2053 = vmatpush.bf16.msra.mxu0 %v1335
    %2054 = vmatpush.bf16.msra.mxu0 %v1331
    %2055 = vmatpush.bf16.msra.mxu0 %v1327
    %2056 = vmatpush.bf16.msra.mxu0 %v1323
    %2057 = vmatmul.bf16.gmra.mxu0 %v381
    %v2058 = vpop.f32.mrf.mxu0
    %v2059 = vadd.f32 %v2046, %v2058
    %v2060 = vpop.f32.mrf.mxu0
    %2061 = vdwg.mxu0
    %2062 = vmatpush.bf16.msra.mxu0 %v1383
    %2063 = vmatpush.bf16.msra.mxu0 %v1379
    %2064 = vmatpush.bf16.msra.mxu0 %v1375
    %2065 = vmatpush.bf16.msra.mxu0 %v1371
    %2066 = vmatpush.bf16.msra.mxu0 %v1367
    %2067 = vmatpush.bf16.msra.mxu0 %v1363
    %2068 = vmatpush.bf16.msra.mxu0 %v1359
    %2069 = vmatpush.bf16.msra.mxu0 %v1355
    %2070 = vmatmul.bf16.gmra.mxu0 %v382
    %v2071 = vpop.f32.mrf.mxu0
    %v2072 = vadd.f32 %v2059, %v2071
    %v2073 = vpop.f32.mrf.mxu0
    %2074 = vdwg.mxu0
    %2075 = vmatpush.bf16.msra.mxu0 %v1415
    %2076 = vmatpush.bf16.msra.mxu0 %v1411
    %2077 = vmatpush.bf16.msra.mxu0 %v1407
    %2078 = vmatpush.bf16.msra.mxu0 %v1403
    %2079 = vmatpush.bf16.msra.mxu0 %v1399
    %2080 = vmatpush.bf16.msra.mxu0 %v1395
    %2081 = vmatpush.bf16.msra.mxu0 %v1391
    %2082 = vmatpush.bf16.msra.mxu0 %v1387
    %2083 = vmatmul.bf16.gmra.mxu0 %v383
    %v2084 = vpop.f32.mrf.mxu0
    %v2085 = vadd.f32 %v2072, %v2084
    %v2086 = vpop.f32.mrf.mxu0
    %2087 = vdwg.mxu0
    %v2088 = vld [vmem:[#allocation5] sm:$0x3]
    %v2089 = vld [vmem:[#allocation8] sm:$0xff]
    %v2090 = vld [vmem:[#allocation8 + $0x8] sm:$0xff]
    %v2091 = vpack.c.bf16 %v2088, %v2088
    %2094 = vst [vmem:[#allocation1] ss:$2 sm:$0xff] %v2089
    %s2095 = scalar_lea.vmem [#allocation1], 16
    %2096 = vst [vmem:[%s2095] ss:$2 sm:$0xff] %v2090
    %v2097 = vld.sshfl [vmem:[#allocation1] sm:$0xff pattern:$0x75316420]
    %v2098 = vld.sshfl [vmem:[#allocation1 + $0x8] sm:$0xff pattern:$0x75316420]
    %v2099 = vld.sshfl [vmem:[#allocation1 + $0x10] sm:$0xff pattern:$0x75316420]
    %v2100 = vld.sshfl [vmem:[#allocation1 + $0x18] sm:$0xff pattern:$0x75316420]
    %v2105 = vpack.c.bf16 %v2097, %v2097
    %v2106 = vpack.c.bf16 %v2098, %v2098
    %v2107 = vpack.c.bf16 %v2099, %v2099
    %v2108 = vpack.c.bf16 %v2100, %v2100
    %vm2109 = vcmask 31744
    %v2111 = vsel %vm2109, %v2091, 0
    %vm2113 = vcmask 1041408
    %v2115 = vsel %vm2113, %v2105, 0
    %v2118 = vsel %vm2113, %v2106, 0
    %v2121 = vsel %vm2113, %v2107, 0
    %v2124 = vsel %vm2113, %v2108, 0
    %2126 = vmatpush.bf16.msra.mxu0 0
    %2127 = vmatpush.bf16.msra.mxu0 0
    %2128 = vmatpush.bf16.msra.mxu0 0
    %2129 = vmatpush.bf16.msra.mxu0 0
    %2130 = vmatpush.bf16.msra.mxu0 0
    %2131 = vmatpush.bf16.msra.mxu0 0
    %2132 = vmatpush.bf16.msra.mxu0 0
    %2133 = vmatpush.bf16.msra.mxu0 %v2115
    %2134 = vmatmul.bf16.gmra.mxu0 %v2111
    %v2135 = vpop.f32.mrf.mxu0
    %v2136 = vadd.f32 0.0, %v2135
    %v2137 = vpop.f32.mrf.mxu0
    %2138 = vdwg.mxu0
    %2139 = vmatpush.bf16.msra.mxu0 0
    %2140 = vmatpush.bf16.msra.mxu0 0
    %2141 = vmatpush.bf16.msra.mxu0 0
    %2142 = vmatpush.bf16.msra.mxu0 0
    %2143 = vmatpush.bf16.msra.mxu0 0
    %2144 = vmatpush.bf16.msra.mxu0 0
    %2145 = vmatpush.bf16.msra.mxu0 0
    %2146 = vmatpush.bf16.msra.mxu0 %v2118
    %2147 = vmatmul.bf16.gmra.mxu0 %v2111
    %v2148 = vpop.f32.mrf.mxu0
    %v2149 = vadd.f32 0.0, %v2148
    %v2150 = vpop.f32.mrf.mxu0
    %2151 = vdwg.mxu0
    %2152 = vmatpush.bf16.msra.mxu0 0
    %2153 = vmatpush.bf16.msra.mxu0 0
    %2154 = vmatpush.bf16.msra.mxu0 0
    %2155 = vmatpush.bf16.msra.mxu0 0
    %2156 = vmatpush.bf16.msra.mxu0 0
    %2157 = vmatpush.bf16.msra.mxu0 0
    %2158 = vmatpush.bf16.msra.mxu0 0
    %2159 = vmatpush.bf16.msra.mxu0 %v2121
    %2160 = vmatmul.bf16.gmra.mxu0 %v2111
    %v2161 = vpop.f32.mrf.mxu0
    %v2162 = vadd.f32 0.0, %v2161
    %v2163 = vpop.f32.mrf.mxu0
    %2164 = vdwg.mxu0
    %2165 = vmatpush.bf16.msra.mxu0 0
    %2166 = vmatpush.bf16.msra.mxu0 0
    %2167 = vmatpush.bf16.msra.mxu0 0
    %2168 = vmatpush.bf16.msra.mxu0 0
    %2169 = vmatpush.bf16.msra.mxu0 0
    %2170 = vmatpush.bf16.msra.mxu0 0
    %2171 = vmatpush.bf16.msra.mxu0 0
    %2172 = vmatpush.bf16.msra.mxu0 %v2124
    %2173 = vmatmul.bf16.gmra.mxu0 %v2111
    %v2174 = vpop.f32.mrf.mxu0
    %v2175 = vadd.f32 0.0, %v2174
    %v2176 = vpop.f32.mrf.mxu0
    %2177 = vdwg.mxu0
    %v2178 = vadd.f32 %v1773, %v2136
    %v2179 = vadd.f32 %v1877, %v2149
    %v2180 = vadd.f32 %v1981, %v2162
    %v2181 = vadd.f32 %v2085, %v2175
    %v2182 = vmax.f32 %v2178, 0.0
    %v2183 = vmax.f32 %v2179, 0.0
    %v2184 = vmax.f32 %v2180, 0.0
    %v2185 = vmax.f32 %v2181, 0.0
    %v2186 = vpack.c.bf16 %v2182, %v2182
    %v2187 = vpack.c.bf16 %v2183, %v2183
    %v2188 = vpack.c.bf16 %v2184, %v2184
    %v2189 = vpack.c.bf16 %v2185, %v2185
    %v2190 = vld [vmem:[#allocation10] sm:$0xff]
    %v2191 = vld [vmem:[#allocation10 + $0x8] sm:$0xff]
    %v2192 = vld [vmem:[#allocation10 + $0x10] sm:$0xff]
    %v2193 = vld [vmem:[#allocation10 + $0x18] sm:$0xff]
    %v2194 = vld [vmem:[#allocation10 + $0x20] sm:$0xff]
    %v2195 = vld [vmem:[#allocation10 + $0x28] sm:$0xff]
    %v2196 = vld [vmem:[#allocation10 + $0x30] sm:$0xff]
    %v2197 = vld [vmem:[#allocation10 + $0x38] sm:$0xff]
    %v2198 = vld [vmem:[#allocation10 + $0x40] sm:$0xff]
    %v2199 = vld [vmem:[#allocation10 + $0x48] sm:$0xff]
    %v2200 = vld [vmem:[#allocation10 + $0x50] sm:$0xff]
    %v2201 = vld [vmem:[#allocation10 + $0x58] sm:$0xff]
    %v2202 = vld [vmem:[#allocation10 + $0x60] sm:$0xff]
    %v2203 = vld [vmem:[#allocation10 + $0x68] sm:$0xff]
    %v2204 = vld [vmem:[#allocation10 + $0x70] sm:$0xff]
    %v2205 = vld [vmem:[#allocation10 + $0x78] sm:$0xff]
    %v2206 = vld [vmem:[#allocation10 + $0x80] sm:$0xff]
    %v2207 = vld [vmem:[#allocation10 + $0x88] sm:$0xff]
    %v2208 = vld [vmem:[#allocation10 + $0x90] sm:$0xff]
    %v2209 = vld [vmem:[#allocation10 + $0x98] sm:$0xff]
    %v2210 = vld [vmem:[#allocation10 + $0xa0] sm:$0xff]
    %v2211 = vld [vmem:[#allocation10 + $0xa8] sm:$0xff]
    %v2212 = vld [vmem:[#allocation10 + $0xb0] sm:$0xff]
    %v2213 = vld [vmem:[#allocation10 + $0xb8] sm:$0xff]
    %v2214 = vld [vmem:[#allocation10 + $0xc0] sm:$0xff]
    %v2215 = vld [vmem:[#allocation10 + $0xc8] sm:$0xff]
    %v2216 = vld [vmem:[#allocation10 + $0xd0] sm:$0xff]
    %v2217 = vld [vmem:[#allocation10 + $0xd8] sm:$0xff]
    %v2218 = vld [vmem:[#allocation10 + $0xe0] sm:$0xff]
    %v2219 = vld [vmem:[#allocation10 + $0xe8] sm:$0xff]
    %v2220 = vld [vmem:[#allocation10 + $0xf0] sm:$0xff]
    %v2221 = vld [vmem:[#allocation10 + $0xf8] sm:$0xff]
    %v2222 = vld [vmem:[#allocation10 + $0x100] sm:$0xff]
    %v2223 = vld [vmem:[#allocation10 + $0x108] sm:$0xff]
    %v2224 = vld [vmem:[#allocation10 + $0x110] sm:$0xff]
    %v2225 = vld [vmem:[#allocation10 + $0x118] sm:$0xff]
    %v2226 = vld [vmem:[#allocation10 + $0x120] sm:$0xff]
    %v2227 = vld [vmem:[#allocation10 + $0x128] sm:$0xff]
    %v2228 = vld [vmem:[#allocation10 + $0x130] sm:$0xff]
    %v2229 = vld [vmem:[#allocation10 + $0x138] sm:$0xff]
    %v2230 = vld [vmem:[#allocation10 + $0x140] sm:$0xff]
    %v2231 = vld [vmem:[#allocation10 + $0x148] sm:$0xff]
    %v2232 = vld [vmem:[#allocation10 + $0x150] sm:$0xff]
    %v2233 = vld [vmem:[#allocation10 + $0x158] sm:$0xff]
    %v2234 = vld [vmem:[#allocation10 + $0x160] sm:$0xff]
    %v2235 = vld [vmem:[#allocation10 + $0x168] sm:$0xff]
    %v2236 = vld [vmem:[#allocation10 + $0x170] sm:$0xff]
    %v2237 = vld [vmem:[#allocation10 + $0x178] sm:$0xff]
    %v2238 = vld [vmem:[#allocation10 + $0x180] sm:$0xff]
    %v2239 = vld [vmem:[#allocation10 + $0x188] sm:$0xff]
    %v2240 = vld [vmem:[#allocation10 + $0x190] sm:$0xff]
    %v2241 = vld [vmem:[#allocation10 + $0x198] sm:$0xff]
    %v2242 = vld [vmem:[#allocation10 + $0x1a0] sm:$0xff]
    %v2243 = vld [vmem:[#allocation10 + $0x1a8] sm:$0xff]
    %v2244 = vld [vmem:[#allocation10 + $0x1b0] sm:$0xff]
    %v2245 = vld [vmem:[#allocation10 + $0x1b8] sm:$0xff]
    %v2246 = vld [vmem:[#allocation10 + $0x1c0] sm:$0xff]
    %v2247 = vld [vmem:[#allocation10 + $0x1c8] sm:$0xff]
    %v2248 = vld [vmem:[#allocation10 + $0x1d0] sm:$0xff]
    %v2249 = vld [vmem:[#allocation10 + $0x1d8] sm:$0xff]
    %v2250 = vld [vmem:[#allocation10 + $0x1e0] sm:$0xff]
    %v2251 = vld [vmem:[#allocation10 + $0x1e8] sm:$0xff]
    %v2252 = vld [vmem:[#allocation10 + $0x1f0] sm:$0xff]
    %v2253 = vld [vmem:[#allocation10 + $0x1f8] sm:$0xff]
    %v2254 = vld [vmem:[%s6] sm:$0x3]
    %v2256 = vperm.slane %v2254, 0
    %v2257 = vperm.slane %v2254, 1
    %v2324 = vunpack.c.l.b16 %v2190
    %v2325 = vunpack.c.h.b16 %v2190
    %v2326 = vunpack.c.l.b16 %v2191
    %v2327 = vunpack.c.h.b16 %v2191
    %v2328 = vunpack.c.l.b16 %v2192
    %v2329 = vunpack.c.h.b16 %v2192
    %v2330 = vunpack.c.l.b16 %v2193
    %v2331 = vunpack.c.h.b16 %v2193
    %v2332 = vunpack.c.l.b16 %v2194
    %v2333 = vunpack.c.h.b16 %v2194
    %v2334 = vunpack.c.l.b16 %v2195
    %v2335 = vunpack.c.h.b16 %v2195
    %v2336 = vunpack.c.l.b16 %v2196
    %v2337 = vunpack.c.h.b16 %v2196
    %v2338 = vunpack.c.l.b16 %v2197
    %v2339 = vunpack.c.h.b16 %v2197
    %v2340 = vunpack.c.l.b16 %v2198
    %v2341 = vunpack.c.h.b16 %v2198
    %v2342 = vunpack.c.l.b16 %v2199
    %v2343 = vunpack.c.h.b16 %v2199
    %v2344 = vunpack.c.l.b16 %v2200
    %v2345 = vunpack.c.h.b16 %v2200
    %v2346 = vunpack.c.l.b16 %v2201
    %v2347 = vunpack.c.h.b16 %v2201
    %v2348 = vunpack.c.l.b16 %v2202
    %v2349 = vunpack.c.h.b16 %v2202
    %v2350 = vunpack.c.l.b16 %v2203
    %v2351 = vunpack.c.h.b16 %v2203
    %v2352 = vunpack.c.l.b16 %v2204
    %v2353 = vunpack.c.h.b16 %v2204
    %v2354 = vunpack.c.l.b16 %v2205
    %v2355 = vunpack.c.h.b16 %v2205
    %v2356 = vunpack.c.l.b16 %v2206
    %v2357 = vunpack.c.h.b16 %v2206
    %v2358 = vunpack.c.l.b16 %v2207
    %v2359 = vunpack.c.h.b16 %v2207
    %v2360 = vunpack.c.l.b16 %v2208
    %v2361 = vunpack.c.h.b16 %v2208
    %v2362 = vunpack.c.l.b16 %v2209
    %v2363 = vunpack.c.h.b16 %v2209
    %v2364 = vunpack.c.l.b16 %v2210
    %v2365 = vunpack.c.h.b16 %v2210
    %v2366 = vunpack.c.l.b16 %v2211
    %v2367 = vunpack.c.h.b16 %v2211
    %v2368 = vunpack.c.l.b16 %v2212
    %v2369 = vunpack.c.h.b16 %v2212
    %v2370 = vunpack.c.l.b16 %v2213
    %v2371 = vunpack.c.h.b16 %v2213
    %v2372 = vunpack.c.l.b16 %v2214
    %v2373 = vunpack.c.h.b16 %v2214
    %v2374 = vunpack.c.l.b16 %v2215
    %v2375 = vunpack.c.h.b16 %v2215
    %v2376 = vunpack.c.l.b16 %v2216
    %v2377 = vunpack.c.h.b16 %v2216
    %v2378 = vunpack.c.l.b16 %v2217
    %v2379 = vunpack.c.h.b16 %v2217
    %v2380 = vunpack.c.l.b16 %v2218
    %v2381 = vunpack.c.h.b16 %v2218
    %v2382 = vunpack.c.l.b16 %v2219
    %v2383 = vunpack.c.h.b16 %v2219
    %v2384 = vunpack.c.l.b16 %v2220
    %v2385 = vunpack.c.h.b16 %v2220
    %v2386 = vunpack.c.l.b16 %v2221
    %v2387 = vunpack.c.h.b16 %v2221
    %v2388 = vunpack.c.l.b16 %v2222
    %v2389 = vunpack.c.h.b16 %v2222
    %v2390 = vunpack.c.l.b16 %v2223
    %v2391 = vunpack.c.h.b16 %v2223
    %v2392 = vunpack.c.l.b16 %v2224
    %v2393 = vunpack.c.h.b16 %v2224
    %v2394 = vunpack.c.l.b16 %v2225
    %v2395 = vunpack.c.h.b16 %v2225
    %v2396 = vunpack.c.l.b16 %v2226
    %v2397 = vunpack.c.h.b16 %v2226
    %v2398 = vunpack.c.l.b16 %v2227
    %v2399 = vunpack.c.h.b16 %v2227
    %v2400 = vunpack.c.l.b16 %v2228
    %v2401 = vunpack.c.h.b16 %v2228
    %v2402 = vunpack.c.l.b16 %v2229
    %v2403 = vunpack.c.h.b16 %v2229
    %v2404 = vunpack.c.l.b16 %v2230
    %v2405 = vunpack.c.h.b16 %v2230
    %v2406 = vunpack.c.l.b16 %v2231
    %v2407 = vunpack.c.h.b16 %v2231
    %v2408 = vunpack.c.l.b16 %v2232
    %v2409 = vunpack.c.h.b16 %v2232
    %v2410 = vunpack.c.l.b16 %v2233
    %v2411 = vunpack.c.h.b16 %v2233
    %v2412 = vunpack.c.l.b16 %v2234
    %v2413 = vunpack.c.h.b16 %v2234
    %v2414 = vunpack.c.l.b16 %v2235
    %v2415 = vunpack.c.h.b16 %v2235
    %v2416 = vunpack.c.l.b16 %v2236
    %v2417 = vunpack.c.h.b16 %v2236
    %v2418 = vunpack.c.l.b16 %v2237
    %v2419 = vunpack.c.h.b16 %v2237
    %v2420 = vunpack.c.l.b16 %v2238
    %v2421 = vunpack.c.h.b16 %v2238
    %v2422 = vunpack.c.l.b16 %v2239
    %v2423 = vunpack.c.h.b16 %v2239
    %v2424 = vunpack.c.l.b16 %v2240
    %v2425 = vunpack.c.h.b16 %v2240
    %v2426 = vunpack.c.l.b16 %v2241
    %v2427 = vunpack.c.h.b16 %v2241
    %v2428 = vunpack.c.l.b16 %v2242
    %v2429 = vunpack.c.h.b16 %v2242
    %v2430 = vunpack.c.l.b16 %v2243
    %v2431 = vunpack.c.h.b16 %v2243
    %v2432 = vunpack.c.l.b16 %v2244
    %v2433 = vunpack.c.h.b16 %v2244
    %v2434 = vunpack.c.l.b16 %v2245
    %v2435 = vunpack.c.h.b16 %v2245
    %v2436 = vunpack.c.l.b16 %v2246
    %v2437 = vunpack.c.h.b16 %v2246
    %v2438 = vunpack.c.l.b16 %v2247
    %v2439 = vunpack.c.h.b16 %v2247
    %v2440 = vunpack.c.l.b16 %v2248
    %v2441 = vunpack.c.h.b16 %v2248
    %v2442 = vunpack.c.l.b16 %v2249
    %v2443 = vunpack.c.h.b16 %v2249
    %v2444 = vunpack.c.l.b16 %v2250
    %v2445 = vunpack.c.h.b16 %v2250
    %v2446 = vunpack.c.l.b16 %v2251
    %v2447 = vunpack.c.h.b16 %v2251
    %v2448 = vunpack.c.l.b16 %v2252
    %v2449 = vunpack.c.h.b16 %v2252
    %v2450 = vunpack.c.l.b16 %v2253
    %v2451 = vunpack.c.h.b16 %v2253
    %v2452 = vpack.c.b16 %v2326, %v2324
    %v2453 = vpack.c.b16 %v2327, %v2325
    %v2454 = vpack.c.b16 %v2330, %v2328
    %v2455 = vpack.c.b16 %v2331, %v2329
    %v2456 = vpack.c.b16 %v2334, %v2332
    %v2457 = vpack.c.b16 %v2335, %v2333
    %v2458 = vpack.c.b16 %v2338, %v2336
    %v2459 = vpack.c.b16 %v2339, %v2337
    %v2460 = vpack.c.b16 %v2342, %v2340
    %v2461 = vpack.c.b16 %v2343, %v2341
    %v2462 = vpack.c.b16 %v2346, %v2344
    %v2463 = vpack.c.b16 %v2347, %v2345
    %v2464 = vpack.c.b16 %v2350, %v2348
    %v2465 = vpack.c.b16 %v2351, %v2349
    %v2466 = vpack.c.b16 %v2354, %v2352
    %v2467 = vpack.c.b16 %v2355, %v2353
    %v2468 = vpack.c.b16 %v2358, %v2356
    %v2469 = vpack.c.b16 %v2359, %v2357
    %v2470 = vpack.c.b16 %v2362, %v2360
    %v2471 = vpack.c.b16 %v2363, %v2361
    %v2472 = vpack.c.b16 %v2366, %v2364
    %v2473 = vpack.c.b16 %v2367, %v2365
    %v2474 = vpack.c.b16 %v2370, %v2368
    %v2475 = vpack.c.b16 %v2371, %v2369
    %v2476 = vpack.c.b16 %v2374, %v2372
    %v2477 = vpack.c.b16 %v2375, %v2373
    %v2478 = vpack.c.b16 %v2378, %v2376
    %v2479 = vpack.c.b16 %v2379, %v2377
    %v2480 = vpack.c.b16 %v2382, %v2380
    %v2481 = vpack.c.b16 %v2383, %v2381
    %v2482 = vpack.c.b16 %v2386, %v2384
    %v2483 = vpack.c.b16 %v2387, %v2385
    %v2484 = vpack.c.b16 %v2390, %v2388
    %v2485 = vpack.c.b16 %v2391, %v2389
    %v2486 = vpack.c.b16 %v2394, %v2392
    %v2487 = vpack.c.b16 %v2395, %v2393
    %v2488 = vpack.c.b16 %v2398, %v2396
    %v2489 = vpack.c.b16 %v2399, %v2397
    %v2490 = vpack.c.b16 %v2402, %v2400
    %v2491 = vpack.c.b16 %v2403, %v2401
    %v2492 = vpack.c.b16 %v2406, %v2404
    %v2493 = vpack.c.b16 %v2407, %v2405
    %v2494 = vpack.c.b16 %v2410, %v2408
    %v2495 = vpack.c.b16 %v2411, %v2409
    %v2496 = vpack.c.b16 %v2414, %v2412
    %v2497 = vpack.c.b16 %v2415, %v2413
    %v2498 = vpack.c.b16 %v2418, %v2416
    %v2499 = vpack.c.b16 %v2419, %v2417
    %v2500 = vpack.c.b16 %v2422, %v2420
    %v2501 = vpack.c.b16 %v2423, %v2421
    %v2502 = vpack.c.b16 %v2426, %v2424
    %v2503 = vpack.c.b16 %v2427, %v2425
    %v2504 = vpack.c.b16 %v2430, %v2428
    %v2505 = vpack.c.b16 %v2431, %v2429
    %v2506 = vpack.c.b16 %v2434, %v2432
    %v2507 = vpack.c.b16 %v2435, %v2433
    %v2508 = vpack.c.b16 %v2438, %v2436
    %v2509 = vpack.c.b16 %v2439, %v2437
    %v2510 = vpack.c.b16 %v2442, %v2440
    %v2511 = vpack.c.b16 %v2443, %v2441
    %v2512 = vpack.c.b16 %v2446, %v2444
    %v2513 = vpack.c.b16 %v2447, %v2445
    %v2514 = vpack.c.b16 %v2450, %v2448
    %v2515 = vpack.c.b16 %v2451, %v2449
    %2580 = vmatpush.bf16.msra.mxu0 %v2466
    %2581 = vmatpush.bf16.msra.mxu0 %v2464
    %2582 = vmatpush.bf16.msra.mxu0 %v2462
    %2583 = vmatpush.bf16.msra.mxu0 %v2460
    %2584 = vmatpush.bf16.msra.mxu0 %v2458
    %2585 = vmatpush.bf16.msra.mxu0 %v2456
    %2586 = vmatpush.bf16.msra.mxu0 %v2454
    %2587 = vmatpush.bf16.msra.mxu0 %v2452
    %2588 = vmatmul.bf16.gmra.mxu0 %v2186
    %v2589 = vpop.f32.mrf.mxu0
    %v2590 = vadd.f32 %v2256, %v2589
    %v2591 = vpop.f32.mrf.mxu0
    %2592 = vdwg.mxu0
    %2593 = vmatpush.bf16.msra.mxu0 %v2482
    %2594 = vmatpush.bf16.msra.mxu0 %v2480
    %2595 = vmatpush.bf16.msra.mxu0 %v2478
    %2596 = vmatpush.bf16.msra.mxu0 %v2476
    %2597 = vmatpush.bf16.msra.mxu0 %v2474
    %2598 = vmatpush.bf16.msra.mxu0 %v2472
    %2599 = vmatpush.bf16.msra.mxu0 %v2470
    %2600 = vmatpush.bf16.msra.mxu0 %v2468
    %2601 = vmatmul.bf16.gmra.mxu0 %v2187
    %v2602 = vpop.f32.mrf.mxu0
    %v2603 = vadd.f32 %v2590, %v2602
    %v2604 = vpop.f32.mrf.mxu0
    %2605 = vdwg.mxu0
    %2606 = vmatpush.bf16.msra.mxu0 %v2498
    %2607 = vmatpush.bf16.msra.mxu0 %v2496
    %2608 = vmatpush.bf16.msra.mxu0 %v2494
    %2609 = vmatpush.bf16.msra.mxu0 %v2492
    %2610 = vmatpush.bf16.msra.mxu0 %v2490
    %2611 = vmatpush.bf16.msra.mxu0 %v2488
    %2612 = vmatpush.bf16.msra.mxu0 %v2486
    %2613 = vmatpush.bf16.msra.mxu0 %v2484
    %2614 = vmatmul.bf16.gmra.mxu0 %v2188
    %v2615 = vpop.f32.mrf.mxu0
    %v2616 = vadd.f32 %v2603, %v2615
    %v2617 = vpop.f32.mrf.mxu0
    %2618 = vdwg.mxu0
    %2619 = vmatpush.bf16.msra.mxu0 %v2514
    %2620 = vmatpush.bf16.msra.mxu0 %v2512
    %2621 = vmatpush.bf16.msra.mxu0 %v2510
    %2622 = vmatpush.bf16.msra.mxu0 %v2508
    %2623 = vmatpush.bf16.msra.mxu0 %v2506
    %2624 = vmatpush.bf16.msra.mxu0 %v2504
    %2625 = vmatpush.bf16.msra.mxu0 %v2502
    %2626 = vmatpush.bf16.msra.mxu0 %v2500
    %2627 = vmatmul.bf16.gmra.mxu0 %v2189
    %v2628 = vpop.f32.mrf.mxu0
    %v2629 = vadd.f32 %v2616, %v2628
    %v2630 = vpop.f32.mrf.mxu0
    %2631 = vdwg.mxu0
    %2632 = vmatpush.bf16.msra.mxu0 %v2467
    %2633 = vmatpush.bf16.msra.mxu0 %v2465
    %2634 = vmatpush.bf16.msra.mxu0 %v2463
    %2635 = vmatpush.bf16.msra.mxu0 %v2461
    %2636 = vmatpush.bf16.msra.mxu0 %v2459
    %2637 = vmatpush.bf16.msra.mxu0 %v2457
    %2638 = vmatpush.bf16.msra.mxu0 %v2455
    %2639 = vmatpush.bf16.msra.mxu0 %v2453
    %2640 = vmatmul.bf16.gmra.mxu0 %v2186
    %v2641 = vpop.f32.mrf.mxu0
    %v2642 = vadd.f32 %v2257, %v2641
    %v2643 = vpop.f32.mrf.mxu0
    %2644 = vdwg.mxu0
    %2645 = vmatpush.bf16.msra.mxu0 %v2483
    %2646 = vmatpush.bf16.msra.mxu0 %v2481
    %2647 = vmatpush.bf16.msra.mxu0 %v2479
    %2648 = vmatpush.bf16.msra.mxu0 %v2477
    %2649 = vmatpush.bf16.msra.mxu0 %v2475
    %2650 = vmatpush.bf16.msra.mxu0 %v2473
    %2651 = vmatpush.bf16.msra.mxu0 %v2471
    %2652 = vmatpush.bf16.msra.mxu0 %v2469
    %2653 = vmatmul.bf16.gmra.mxu0 %v2187
    %v2654 = vpop.f32.mrf.mxu0
    %v2655 = vadd.f32 %v2642, %v2654
    %v2656 = vpop.f32.mrf.mxu0
    %2657 = vdwg.mxu0
    %2658 = vmatpush.bf16.msra.mxu0 %v2499
    %2659 = vmatpush.bf16.msra.mxu0 %v2497
    %2660 = vmatpush.bf16.msra.mxu0 %v2495
    %2661 = vmatpush.bf16.msra.mxu0 %v2493
    %2662 = vmatpush.bf16.msra.mxu0 %v2491
    %2663 = vmatpush.bf16.msra.mxu0 %v2489
    %2664 = vmatpush.bf16.msra.mxu0 %v2487
    %2665 = vmatpush.bf16.msra.mxu0 %v2485
    %2666 = vmatmul.bf16.gmra.mxu0 %v2188
    %v2667 = vpop.f32.mrf.mxu0
    %v2668 = vadd.f32 %v2655, %v2667
    %v2669 = vpop.f32.mrf.mxu0
    %2670 = vdwg.mxu0
    %2671 = vmatpush.bf16.msra.mxu0 %v2515
    %2672 = vmatpush.bf16.msra.mxu0 %v2513
    %2673 = vmatpush.bf16.msra.mxu0 %v2511
    %2674 = vmatpush.bf16.msra.mxu0 %v2509
    %2675 = vmatpush.bf16.msra.mxu0 %v2507
    %2676 = vmatpush.bf16.msra.mxu0 %v2505
    %2677 = vmatpush.bf16.msra.mxu0 %v2503
    %2678 = vmatpush.bf16.msra.mxu0 %v2501
    %2679 = vmatmul.bf16.gmra.mxu0 %v2189
    %v2680 = vpop.f32.mrf.mxu0
    %v2681 = vadd.f32 %v2668, %v2680
    %v2682 = vpop.f32.mrf.mxu0
    %2683 = vdwg.mxu0
    %v2684 = vmax.f32 %v2629, 0.0
    %v2685 = vmax.f32 %v2681, 0.0
    %v2686 = vld [vmem:[%s7] sm:$0x3]
    %v2688 = vperm.slane %v2686, 0
    %v2689 = vperm.slane %v2686, 1
    %v2692 = vmul.f32 %v2684, %v2688
    %v2693 = vmul.f32 %v2685, %v2689
    %v2694 = vsel %vm2113, %v2692, 0.0
    %v2695 = vsel %vm2113, %v2693, 0.0
    %v2696 = vadd.f32 %v2694, %v2695
    %2697 = vadd.xlane.f32.xlu0 %v2696
    %v2698 = vpop.xlane.xlu0 %2697
    %v2699 = vld [vmem:[#allocation2] sm:$0x1]
    %v2701 = vperm.slane %v2699, 0
    %v2703 = vadd.f32 %v2698, %v2701
    %vm2704 = vcmask 1024
    %2705 = vst.msk [vmem:[%s9] sm:$0x3] %vm2704, %v2703
    // Predicated region
    $region58: #{tpu_custom_call.1} parent=1 // pred_check
      _
    $region59: #{tpu_custom_call.1} parent=1 // pred_check_branch
      %2707 = sbr.rel (0) target = $region61
    $region60: #{tpu_custom_call.1} parent=1 // pred_region
      _
    $region61: #{tpu_custom_call.1} parent=1 // pred_fallthru
      _
    // Predicated region
    $region62: #{tpu_custom_call.1} parent=1 // pred_check
      _
    $region63: #{tpu_custom_call.1} parent=1 // pred_check_branch
      %2709 = sbr.rel (0) target = $region65
    $region64: #{tpu_custom_call.1} parent=1 // pred_region
      _
    $region65: #{tpu_custom_call.1} parent=1 // pred_fallthru
      _
    %2710 = vsyncpa [#allocation4], 1
    %2711 = vsyncpa [#allocation6], 1
    %2712 = vsyncpa [#allocation9], 1

</llo_original>
